<compile_context>
chip_gen: v7x
topology: tpu7x:2x2x1
jax: 0.10.0
libtpu: 0.0.40
codegen_flags: <defaults>
</compile_context>

<pallas_src>
import functools

import jax
import jax.numpy as jnp
from jax import lax
from jax.experimental import pallas as pl
from jax.experimental.pallas import tpu as pltpu

# ---- module config ----
ROLE = 16            # role_size
ENT = 32             # entity_size
SLOT = 32            # slot_size
N_ATT = 5            # attention-mask length
EPS = 1e-6
RF = ROLE * ENT      # 512 : fused (role, ent_f) lane axis
NS = N_ATT * SLOT    # 160 : flattened (slot, feature) input axis
O_PAD = 128          # padded projection width (2*ENT + 3*ROLE = 112 -> 128)


# ---------------------------------------------------------------------------
# Fused kernel: projections + sequential TPR recurrence (one batch / grid step)
# ---------------------------------------------------------------------------
def update_kernel(x_ref, xT_ref, wc_ref, bc_ref, wec_ref, bec_ref,
                  mrep_r_ref, mrep_f_ref, mseg_ref, out_ref,
                  e1r_ref, e2r_ref, r1e_ref, r2e_ref, r3e_ref, a1_ref, a3_ref):
    S = x_ref.shape[1]
    F = ENT
    R = ROLE
    dot = functools.partial(jnp.dot, preferred_element_type=jnp.float32)

    # ---- fused projection: all 5 heads, attention mask folded into weights --
    y = jnp.tanh(dot(x_ref[0], wc_ref[...]) + bc_ref[...])          # (S, 128)
    e1 = y[:, 0:F]                                                   # (S, F)
    e2 = y[:, F:2 * F]
    r1 = y[:, 2 * F:2 * F + R]                                       # (S, R)
    r2 = y[:, 2 * F + R:2 * F + 2 * R]
    r3 = y[:, 2 * F + 2 * R:2 * F + 3 * R]

    # ---- hoisted loop-invariant expansions (one MXU pass for all S steps) ---
    mrep_r = mrep_r_ref[...]          # (R, RF): row r -> ones where c // F == r
    mrep_f = mrep_f_ref[...]          # (F, RF): row f -> ones where c %  F == f
    r1e = dot(r1, mrep_r)             # (S, RF): r1[s, c // F]
    r2e = dot(r2, mrep_r)
    r3e = dot(r3, mrep_r)
    e1t = dot(e1, mrep_f)             # (S, RF): e1[s, c % F]
    e2t = dot(e2, mrep_f)

    e1r_ref[...] = e1
    e2r_ref[...] = e2
    r1e_ref[...] = r1e
    r2e_ref[...] = r2e
    r3e_ref[...] = r3e
    a1_ref[...] = r1e * e2t           # partial_add_W  (tiled lane layout)
    a3_ref[...] = r3e * e1t           # partial_add_B  (tiled lane layout)

    # column-form e1/e2 for the final outer product, computed from x^T so no
    # in-kernel transpose is needed:  (2F, S)
    ecol_all = jnp.tanh(dot(wec_ref[...], xT_ref[0]) + bec_ref[...])
    lane_iota = lax.broadcasted_iota(jnp.int32, (1, S), 1)

    # ---- sequential TPR recurrence ------------------------------------------
    def step(s, tpr):                 # tpr: (F, RF) flattened as (e, r*F + f)
        e1_s = e1r_ref[pl.ds(s, 1), :]          # (1, F)
        e2_s = e2r_ref[pl.ds(s, 1), :]
        r1e_s = r1e_ref[pl.ds(s, 1), :]         # (1, RF)
        r2e_s = r2e_ref[pl.ds(s, 1), :]
        r3e_s = r3e_ref[pl.ds(s, 1), :]
        a1_s = a1_ref[pl.ds(s, 1), :]
        a3_s = a3_ref[pl.ds(s, 1), :]

        # one MXU push for both entity contractions:  [e1; e2] @ TPR
        e12_s = jnp.concatenate([e1_s, e2_s], axis=0)                # (2, F)
        tmp12 = dot(e12_s, tpr)                                      # (2, RF)
        tmp1 = tmp12[0:1, :]
        tmp2 = tmp12[1:2, :]

        # stacked hat terms: one segment-sum push + one re-tile push
        x3 = jnp.concatenate(
            [r1e_s * tmp1, r2e_s * tmp1, r3e_s * tmp2], axis=0)      # (3, RF)
        hats = dot(x3, mseg_ref[...])                                # (3, F)
        hats_t = dot(hats, mrep_f_ref[...])                          # (3, RF)
        w_hat_t = hats_t[0:1, :]
        m_hat_t = hats_t[1:2, :]
        b_hat_t = hats_t[2:3, :]

        # write_op + move_op and backlink_op (in tiled lane layout)
        wm = a1_s + (r2e_s - r1e_s) * w_hat_t - r2e_s * m_hat_t      # (1, RF)
        bo = a3_s - r3e_s * b_hat_t                                  # (1, RF)

        # per-step e1/e2 columns via a cheap lane select (no dynamic lane slice)
        onehot = (lane_iota == s).astype(jnp.float32)                # (1, S)
        ecols = jnp.sum(ecol_all * onehot, axis=1, keepdims=True)    # (2F, 1)
        e1c = ecols[0:F, :]
        e2c = ecols[F:2 * F, :]

        delta = jnp.clip(e1c * wm + e2c * bo, -1.0, 1.0)             # (F, RF)
        return tpr + delta

    tpr0 = jnp.zeros((F, RF), jnp.float32)
    out_ref[0] = lax.fori_loop(0, S, step, tpr0)


# ---------------------------------------------------------------------------
# Parameters / wrapper
# ---------------------------------------------------------------------------
def init_params(key):
    params = {}
    bound = 1.0 / float(jnp.sqrt(jnp.float32(SLOT)))
    out_dims = {"e1": ENT, "e2": ENT, "r1": ROLE, "r2": ROLE, "r3": ROLE}
    for name, odim in out_dims.items():
        key, k1, k2 = jax.random.split(key, 3)
        params[name + "_w"] = jax.random.uniform(k1, (odim, SLOT), jnp.float32,
                                                 -bound, bound)
        params[name + "_b"] = jax.random.uniform(k2, (odim,), jnp.float32,
                                                 -bound, bound)
    return params


def _lane_constants():
    c = jnp.arange(RF)
    mrep_r = (c[None, :] // ENT == jnp.arange(ROLE)[:, None]).astype(jnp.float32)  # (R, RF)
    mrep_f = (c[None, :] % ENT == jnp.arange(ENT)[:, None]).astype(jnp.float32)    # (F, RF)
    mseg = mrep_f.T                                                                 # (RF, F)
    return mrep_r, mrep_f, mseg


def update_module_forward(slots, params):
    B, S, N, E = slots.shape
    assert N == N_ATT and E == SLOT
    mask = jnp.array([1.0 - 4 * EPS, EPS, EPS, EPS, EPS], jnp.float32)

    heads = [("e1", 0, ENT), ("e2", 1, ENT),
             ("r1", 2, ROLE), ("r2", 3, ROLE), ("r3", 4, ROLE)]
    w_list, b_list = [], []
    for name, k, odim in heads:
        m = jnp.roll(mask, k)
        W = params[name + "_w"]                                   # (odim, SLOT)
        # fold the attention-mask contraction into the linear weight
        Wc = (m[:, None, None] * W.T[None, :, :]).reshape(NS, odim)
        w_list.append(Wc)
        b_list.append(params[name + "_b"])

    w_comb = jnp.concatenate(w_list, axis=1)                      # (NS, 112)
    b_comb = jnp.concatenate(b_list)                              # (112,)
    o = w_comb.shape[1]
    w_comb = jnp.pad(w_comb, ((0, 0), (0, O_PAD - o)))            # (NS, 128)
    b_comb = jnp.pad(b_comb, (0, O_PAD - o))[None, :]             # (1, 128)

    # column-form weights for e1/e2 (so the kernel never transposes)
    w_ecT = jnp.concatenate([w_list[0].T, w_list[1].T], axis=0)   # (2*ENT, NS)
    b_ecol = jnp.concatenate([b_list[0], b_list[1]])[:, None]     # (2*ENT, 1)

    mrep_r, mrep_f, mseg = _lane_constants()

    x = slots.astype(jnp.float32).reshape(B, S, NS)
    xT = jnp.swapaxes(x, 1, 2)                                    # (B, NS, S)

    out = pl.pallas_call(
        update_kernel,
        out_shape=jax.ShapeDtypeStruct((B, ENT, RF), jnp.float32),
        grid=(B,),
        in_specs=[
            pl.BlockSpec((1, S, NS), lambda b: (b, 0, 0)),
            pl.BlockSpec((1, NS, S), lambda b: (b, 0, 0)),
            pl.BlockSpec((NS, O_PAD), lambda b: (0, 0)),
            pl.BlockSpec((1, O_PAD), lambda b: (0, 0)),
            pl.BlockSpec((2 * ENT, NS), lambda b: (0, 0)),
            pl.BlockSpec((2 * ENT, 1), lambda b: (0, 0)),
            pl.BlockSpec((ROLE, RF), lambda b: (0, 0)),
            pl.BlockSpec((ENT, RF), lambda b: (0, 0)),
            pl.BlockSpec((RF, ENT), lambda b: (0, 0)),
        ],
        out_specs=pl.BlockSpec((1, ENT, RF), lambda b: (b, 0, 0)),
        scratch_shapes=[
            pltpu.VMEM((S, ENT), jnp.float32),   # e1 rows
            pltpu.VMEM((S, ENT), jnp.float32),   # e2 rows
            pltpu.VMEM((S, RF), jnp.float32),    # r1e
            pltpu.VMEM((S, RF), jnp.float32),    # r2e
            pltpu.VMEM((S, RF), jnp.float32),    # r3e
            pltpu.VMEM((S, RF), jnp.float32),    # partial_add_W (tiled)
            pltpu.VMEM((S, RF), jnp.float32),    # partial_add_B (tiled)
        ],
        compiler_params=pltpu.CompilerParams(
            dimension_semantics=("parallel",)),
    )(x, xT, w_comb, b_comb, w_ecT, b_ecol, mrep_r, mrep_f, mseg)

    return out.reshape(B, ENT, ROLE, ENT)


# ---------------------------------------------------------------------------
# Pure-JAX reference mirroring the PyTorch forward (for verification)
# ---------------------------------------------------------------------------
def reference_forward(slots, params):
    mask = jnp.array([1.0 - 4 * EPS, EPS, EPS, EPS, EPS], jnp.float32)

    def head(k, W, b):
        x = jnp.einsum('bsne,n->bse', slots, jnp.roll(mask, k))
        return jnp.tanh(x @ W.T + b)

    e1 = head(0, params['e1_w'], params['e1_b'])
    e2 = head(1, params['e2_w'], params['e2_b'])
    r1 = head(2, params['r1_w'], params['r1_b'])
    r2 = head(3, params['r2_w'], params['r2_b'])
    r3 = head(4, params['r3_w'], params['r3_b'])

    B, S, _ = e1.shape
    paw = jnp.einsum('bsr,bsf->bsrf', r1, e2)
    pab = jnp.einsum('bsr,bsf->bsrf', r3, e1)
    TPR = jnp.zeros((B, ENT, ROLE, ENT), jnp.float32)
    for s in range(S):
        e1_i, e2_i = e1[:, s], e2[:, s]
        r1_i, r2_i, r3_i = r1[:, s], r2[:, s], r3[:, s]
        w_hat = jnp.einsum('be,br,berf->bf', e1_i, r1_i, TPR)
        prw = jnp.einsum('br,bf->brf', r1_i, w_hat)
        m_hat = jnp.einsum('be,br,berf->bf', e1_i, r2_i, TPR)
        prm = jnp.einsum('br,bf->brf', r2_i, m_hat)
        pam = jnp.einsum('br,bf->brf', r2_i, w_hat)
        b_hat = jnp.einsum('be,br,berf->bf', e2_i, r3_i, TPR)
        prb = jnp.einsum('br,bf->brf', r3_i, b_hat)
        write_op = paw[:, s] - prw
        move_op = pam - prm
        back_op = pab[:, s] - prb
        delta = (jnp.einsum('be,brf->berf', e1_i, write_op + move_op)
                 + jnp.einsum('be,brf->berf', e2_i, back_op))
        delta = jnp.clip(delta, -1.0, 1.0)
        TPR = TPR + delta
    return TPR


if __name__ == "__main__":
    key = jax.random.PRNGKey(0)
    kp, ks = jax.random.split(key)
    params = init_params(kp)

    B, S = 2, 8
    slots = jax.random.normal(ks, (B, S, N_ATT, SLOT), jnp.float32)

    out = jax.block_until_ready(update_module_forward(slots, params))
    assert out.shape == (B, ENT, ROLE, ENT)

    ref = reference_forward(slots, params)
    err = float(jnp.max(jnp.abs(out - ref)))
    # Tolerance accounts for MXU f32 (multi-pass bf16) vs XLA rounding over the
    # S-step accumulation; previous run measured ~1.1e-4.
    if err > 5e-3:
        raise ValueError(f"Pallas kernel mismatch vs reference, max abs err = {err}")

    print("KERNEL_OK")
</pallas_src>

<mosaic_0001>
module attributes {stable_mosaic.version = 11 : i64} {
  func.func @update_kernel(%arg0: i32, %arg1: memref<1x8x160xf32, #tpu.memory_space<vmem>>, %arg2: memref<1x160x8xf32, #tpu.memory_space<vmem>>, %arg3: memref<160x128xf32, #tpu.memory_space<vmem>>, %arg4: memref<1x128xf32, #tpu.memory_space<vmem>>, %arg5: memref<64x160xf32, #tpu.memory_space<vmem>>, %arg6: memref<64x1xf32, #tpu.memory_space<vmem>>, %arg7: memref<16x512xf32, #tpu.memory_space<vmem>>, %arg8: memref<32x512xf32, #tpu.memory_space<vmem>>, %arg9: memref<512x32xf32, #tpu.memory_space<vmem>>, %arg10: memref<1x32x512xf32, #tpu.memory_space<vmem>>, %arg11: memref<8x32xf32, #tpu.memory_space<vmem>>, %arg12: memref<8x32xf32, #tpu.memory_space<vmem>>, %arg13: memref<8x512xf32, #tpu.memory_space<vmem>>, %arg14: memref<8x512xf32, #tpu.memory_space<vmem>>, %arg15: memref<8x512xf32, #tpu.memory_space<vmem>>, %arg16: memref<8x512xf32, #tpu.memory_space<vmem>>, %arg17: memref<8x512xf32, #tpu.memory_space<vmem>>) attributes {dimension_semantics = [#tpu.dimension_semantics<parallel>], iteration_bounds = array<i64: 2>, scalar_prefetch = 0 : i64, scratch_operands = 7 : i64, tpu.core_type = #tpu.core_type<tc>, window_params = [{transform_indices = @transform_0, window_bounds = array<i64: 1, 8, 160>}, {transform_indices = @transform_1, window_bounds = array<i64: 1, 160, 8>}, {pipeline_mode = #tpu.pipeline_mode<synchronous>, transform_indices = @transform_2, window_bounds = array<i64: 160, 128>}, {pipeline_mode = #tpu.pipeline_mode<synchronous>, transform_indices = @transform_3, window_bounds = array<i64: 1, 128>}, {pipeline_mode = #tpu.pipeline_mode<synchronous>, transform_indices = @transform_4, window_bounds = array<i64: 64, 160>}, {pipeline_mode = #tpu.pipeline_mode<synchronous>, transform_indices = @transform_5, window_bounds = array<i64: 64, 1>}, {pipeline_mode = #tpu.pipeline_mode<synchronous>, transform_indices = @transform_6, window_bounds = array<i64: 16, 512>}, {pipeline_mode = #tpu.pipeline_mode<synchronous>, transform_indices = @transform_7, window_bounds = array<i64: 32, 512>}, {pipeline_mode = #tpu.pipeline_mode<synchronous>, transform_indices = @transform_8, window_bounds = array<i64: 512, 32>}, {transform_indices = @transform_9, window_bounds = array<i64: 1, 32, 512>}]} {
    %c0 = arith.constant 0 : index
    %c0_0 = arith.constant 0 : index
    %c0_1 = arith.constant 0 : index
    %0 = vector.load %arg1[%c0, %c0_0, %c0_1] : memref<1x8x160xf32, #tpu.memory_space<vmem>>, vector<1x8x160xf32>
    %1 = vector.shape_cast %0 : vector<1x8x160xf32> to vector<8x160xf32>
    %c0_2 = arith.constant 0 : index
    %c0_3 = arith.constant 0 : index
    %2 = vector.load %arg3[%c0_2, %c0_3] : memref<160x128xf32, #tpu.memory_space<vmem>>, vector<160x128xf32>
    %cst = arith.constant dense<0.000000e+00> : vector<8x128xf32>
    %3 = tpu.matmul %1, %2, %cst {dimension_numbers = #tpu.dot_dimension_numbers<[1], [0], [0], [1], [0, 0, 1, 1], [], []>} : vector<8x160xf32>, vector<160x128xf32>, vector<8x128xf32> -> vector<8x128xf32>
    %c0_4 = arith.constant 0 : index
    %c0_5 = arith.constant 0 : index
    %4 = vector.load %arg4[%c0_4, %c0_5] : memref<1x128xf32, #tpu.memory_space<vmem>>, vector<1x128xf32>
    %5 = vector.broadcast %4 : vector<1x128xf32> to vector<8x128xf32>
    %6 = arith.addf %3, %5 : vector<8x128xf32>
    %7 = math.tanh %6 : vector<8x128xf32>
    %8 = vector.extract_strided_slice %7 {offsets = [0, 0], sizes = [8, 32], strides = [1, 1]} : vector<8x128xf32> to vector<8x32xf32>
    %9 = vector.extract_strided_slice %7 {offsets = [0, 32], sizes = [8, 32], strides = [1, 1]} : vector<8x128xf32> to vector<8x32xf32>
    %10 = vector.extract_strided_slice %7 {offsets = [0, 64], sizes = [8, 16], strides = [1, 1]} : vector<8x128xf32> to vector<8x16xf32>
    %11 = vector.extract_strided_slice %7 {offsets = [0, 80], sizes = [8, 16], strides = [1, 1]} : vector<8x128xf32> to vector<8x16xf32>
    %12 = vector.extract_strided_slice %7 {offsets = [0, 96], sizes = [8, 16], strides = [1, 1]} : vector<8x128xf32> to vector<8x16xf32>
    %c0_6 = arith.constant 0 : index
    %c0_7 = arith.constant 0 : index
    %13 = vector.load %arg7[%c0_6, %c0_7] : memref<16x512xf32, #tpu.memory_space<vmem>>, vector<16x512xf32>
    %c0_8 = arith.constant 0 : index
    %c0_9 = arith.constant 0 : index
    %14 = vector.load %arg8[%c0_8, %c0_9] : memref<32x512xf32, #tpu.memory_space<vmem>>, vector<32x512xf32>
    %cst_10 = arith.constant dense<0.000000e+00> : vector<8x512xf32>
    %15 = tpu.matmul %10, %13, %cst_10 {dimension_numbers = #tpu.dot_dimension_numbers<[1], [0], [0], [1], [0, 0, 1, 1], [], []>} : vector<8x16xf32>, vector<16x512xf32>, vector<8x512xf32> -> vector<8x512xf32>
    %cst_11 = arith.constant dense<0.000000e+00> : vector<8x512xf32>
    %16 = tpu.matmul %11, %13, %cst_11 {dimension_numbers = #tpu.dot_dimension_numbers<[1], [0], [0], [1], [0, 0, 1, 1], [], []>} : vector<8x16xf32>, vector<16x512xf32>, vector<8x512xf32> -> vector<8x512xf32>
    %cst_12 = arith.constant dense<0.000000e+00> : vector<8x512xf32>
    %17 = tpu.matmul %12, %13, %cst_12 {dimension_numbers = #tpu.dot_dimension_numbers<[1], [0], [0], [1], [0, 0, 1, 1], [], []>} : vector<8x16xf32>, vector<16x512xf32>, vector<8x512xf32> -> vector<8x512xf32>
    %cst_13 = arith.constant dense<0.000000e+00> : vector<8x512xf32>
    %18 = tpu.matmul %8, %14, %cst_13 {dimension_numbers = #tpu.dot_dimension_numbers<[1], [0], [0], [1], [0, 0, 1, 1], [], []>} : vector<8x32xf32>, vector<32x512xf32>, vector<8x512xf32> -> vector<8x512xf32>
    %cst_14 = arith.constant dense<0.000000e+00> : vector<8x512xf32>
    %19 = tpu.matmul %9, %14, %cst_14 {dimension_numbers = #tpu.dot_dimension_numbers<[1], [0], [0], [1], [0, 0, 1, 1], [], []>} : vector<8x32xf32>, vector<32x512xf32>, vector<8x512xf32> -> vector<8x512xf32>
    %c0_15 = arith.constant 0 : index
    %c0_16 = arith.constant 0 : index
    %20 = vector.load %arg11[%c0_15, %c0_16] : memref<8x32xf32, #tpu.memory_space<vmem>>, vector<8x32xf32>
    tpu.vector_store %arg11[%c0_15, %c0_16], %8 {strides = array<i32>} : memref<8x32xf32, #tpu.memory_space<vmem>>, vector<8x32xf32>,
    %c0_17 = arith.constant 0 : index
    %c0_18 = arith.constant 0 : index
    %21 = vector.load %arg12[%c0_17, %c0_18] : memref<8x32xf32, #tpu.memory_space<vmem>>, vector<8x32xf32>
    tpu.vector_store %arg12[%c0_17, %c0_18], %9 {strides = array<i32>} : memref<8x32xf32, #tpu.memory_space<vmem>>, vector<8x32xf32>,
    %c0_19 = arith.constant 0 : index
    %c0_20 = arith.constant 0 : index
    %22 = vector.load %arg13[%c0_19, %c0_20] : memref<8x512xf32, #tpu.memory_space<vmem>>, vector<8x512xf32>
    tpu.vector_store %arg13[%c0_19, %c0_20], %15 {strides = array<i32>} : memref<8x512xf32, #tpu.memory_space<vmem>>, vector<8x512xf32>,
    %c0_21 = arith.constant 0 : index
    %c0_22 = arith.constant 0 : index
    %23 = vector.load %arg14[%c0_21, %c0_22] : memref<8x512xf32, #tpu.memory_space<vmem>>, vector<8x512xf32>
    tpu.vector_store %arg14[%c0_21, %c0_22], %16 {strides = array<i32>} : memref<8x512xf32, #tpu.memory_space<vmem>>, vector<8x512xf32>,
    %c0_23 = arith.constant 0 : index
    %c0_24 = arith.constant 0 : index
    %24 = vector.load %arg15[%c0_23, %c0_24] : memref<8x512xf32, #tpu.memory_space<vmem>>, vector<8x512xf32>
    tpu.vector_store %arg15[%c0_23, %c0_24], %17 {strides = array<i32>} : memref<8x512xf32, #tpu.memory_space<vmem>>, vector<8x512xf32>,
    %25 = arith.mulf %15, %19 : vector<8x512xf32>
    %c0_25 = arith.constant 0 : index
    %c0_26 = arith.constant 0 : index
    %26 = vector.load %arg16[%c0_25, %c0_26] : memref<8x512xf32, #tpu.memory_space<vmem>>, vector<8x512xf32>
    tpu.vector_store %arg16[%c0_25, %c0_26], %25 {strides = array<i32>} : memref<8x512xf32, #tpu.memory_space<vmem>>, vector<8x512xf32>,
    %27 = arith.mulf %17, %18 : vector<8x512xf32>
    %c0_27 = arith.constant 0 : index
    %c0_28 = arith.constant 0 : index
    %28 = vector.load %arg17[%c0_27, %c0_28] : memref<8x512xf32, #tpu.memory_space<vmem>>, vector<8x512xf32>
    tpu.vector_store %arg17[%c0_27, %c0_28], %27 {strides = array<i32>} : memref<8x512xf32, #tpu.memory_space<vmem>>, vector<8x512xf32>,
    %c0_29 = arith.constant 0 : index
    %c0_30 = arith.constant 0 : index
    %29 = vector.load %arg5[%c0_29, %c0_30] : memref<64x160xf32, #tpu.memory_space<vmem>>, vector<64x160xf32>
    %c0_31 = arith.constant 0 : index
    %c0_32 = arith.constant 0 : index
    %c0_33 = arith.constant 0 : index
    %30 = vector.load %arg2[%c0_31, %c0_32, %c0_33] : memref<1x160x8xf32, #tpu.memory_space<vmem>>, vector<1x160x8xf32>
    %31 = vector.shape_cast %30 : vector<1x160x8xf32> to vector<160x8xf32>
    %cst_34 = arith.constant dense<0.000000e+00> : vector<64x8xf32>
    %32 = tpu.matmul %29, %31, %cst_34 {dimension_numbers = #tpu.dot_dimension_numbers<[1], [0], [0], [1], [0, 0, 1, 1], [], []>} : vector<64x160xf32>, vector<160x8xf32>, vector<64x8xf32> -> vector<64x8xf32>
    %c0_35 = arith.constant 0 : index
    %c0_36 = arith.constant 0 : index
    %33 = vector.load %arg6[%c0_35, %c0_36] : memref<64x1xf32, #tpu.memory_space<vmem>>, vector<64x1xf32>
    %34 = vector.broadcast %33 : vector<64x1xf32> to vector<64x8xf32>
    %35 = arith.addf %32, %34 : vector<64x8xf32>
    %36 = math.tanh %35 : vector<64x8xf32>
    %37 = tpu.iota {dimensions = array<i32: 1>} : vector<1x8xi32>
    %cst_37 = arith.constant 0.000000e+00 : f32
    %38 = vector.broadcast %cst_37 : f32 to vector<32x512xf32>
    %c0_i32 = arith.constant 0 : i32
    %c8_i32 = arith.constant 8 : i32
    %39 = arith.addi %c0_i32, %c8_i32 : i32
    %c1_i32 = arith.constant 1 : i32
    %40 = scf.for %arg18 = %c0_i32 to %39 step %c1_i32 iter_args(%arg19 = %38) -> (vector<32x512xf32>)  : i32 {
      %44 = arith.index_cast %arg18 : i32 to index
      %c0_42 = arith.constant 0 : index
      %45 = vector.load %arg11[%44, %c0_42] : memref<8x32xf32, #tpu.memory_space<vmem>>, vector<1x32xf32>
      %46 = arith.index_cast %arg18 : i32 to index
      %c0_43 = arith.constant 0 : index
      %47 = vector.load %arg12[%46, %c0_43] : memref<8x32xf32, #tpu.memory_space<vmem>>, vector<1x32xf32>
      %48 = arith.index_cast %arg18 : i32 to index
      %c0_44 = arith.constant 0 : index
      %49 = vector.load %arg13[%48, %c0_44] : memref<8x512xf32, #tpu.memory_space<vmem>>, vector<1x512xf32>
      %50 = arith.index_cast %arg18 : i32 to index
      %c0_45 = arith.constant 0 : index
      %51 = vector.load %arg14[%50, %c0_45] : memref<8x512xf32, #tpu.memory_space<vmem>>, vector<1x512xf32>
      %52 = arith.index_cast %arg18 : i32 to index
      %c0_46 = arith.constant 0 : index
      %53 = vector.load %arg15[%52, %c0_46] : memref<8x512xf32, #tpu.memory_space<vmem>>, vector<1x512xf32>
      %54 = arith.index_cast %arg18 : i32 to index
      %c0_47 = arith.constant 0 : index
      %55 = vector.load %arg16[%54, %c0_47] : memref<8x512xf32, #tpu.memory_space<vmem>>, vector<1x512xf32>
      %56 = arith.index_cast %arg18 : i32 to index
      %c0_48 = arith.constant 0 : index
      %57 = vector.load %arg17[%56, %c0_48] : memref<8x512xf32, #tpu.memory_space<vmem>>, vector<1x512xf32>
      %58 = tpu.concatenate %45, %47 in 0 : vector<1x32xf32>, vector<1x32xf32> -> vector<2x32xf32>
      %cst_49 = arith.constant dense<0.000000e+00> : vector<2x512xf32>
      %59 = tpu.matmul %58, %arg19, %cst_49 {dimension_numbers = #tpu.dot_dimension_numbers<[1], [0], [0], [1], [0, 0, 1, 1], [], []>} : vector<2x32xf32>, vector<32x512xf32>, vector<2x512xf32> -> vector<2x512xf32>
      %60 = vector.extract_strided_slice %59 {offsets = [0, 0], sizes = [1, 512], strides = [1, 1]} : vector<2x512xf32> to vector<1x512xf32>
      %61 = vector.extract_strided_slice %59 {offsets = [1, 0], sizes = [1, 512], strides = [1, 1]} : vector<2x512xf32> to vector<1x512xf32>
      %62 = arith.mulf %49, %60 : vector<1x512xf32>
      %63 = arith.mulf %51, %60 : vector<1x512xf32>
      %64 = arith.mulf %53, %61 : vector<1x512xf32>
      %65 = tpu.concatenate %62, %63, %64 in 0 : vector<1x512xf32>, vector<1x512xf32>, vector<1x512xf32> -> vector<3x512xf32>
      %c0_50 = arith.constant 0 : index
      %c0_51 = arith.constant 0 : index
      %66 = vector.load %arg9[%c0_50, %c0_51] : memref<512x32xf32, #tpu.memory_space<vmem>>, vector<512x32xf32>
      %cst_52 = arith.constant dense<0.000000e+00> : vector<3x32xf32>
      %67 = tpu.matmul %65, %66, %cst_52 {dimension_numbers = #tpu.dot_dimension_numbers<[1], [0], [0], [1], [0, 0, 1, 1], [], []>} : vector<3x512xf32>, vector<512x32xf32>, vector<3x32xf32> -> vector<3x32xf32>
      %c0_53 = arith.constant 0 : index
      %c0_54 = arith.constant 0 : index
      %68 = vector.load %arg8[%c0_53, %c0_54] : memref<32x512xf32, #tpu.memory_space<vmem>>, vector<32x512xf32>
      %cst_55 = arith.constant dense<0.000000e+00> : vector<3x512xf32>
      %69 = tpu.matmul %67, %68, %cst_55 {dimension_numbers = #tpu.dot_dimension_numbers<[1], [0], [0], [1], [0, 0, 1, 1], [], []>} : vector<3x32xf32>, vector<32x512xf32>, vector<3x512xf32> -> vector<3x512xf32>
      %70 = vector.extract_strided_slice %69 {offsets = [0, 0], sizes = [1, 512], strides = [1, 1]} : vector<3x512xf32> to vector<1x512xf32>
      %71 = vector.extract_strided_slice %69 {offsets = [1, 0], sizes = [1, 512], strides = [1, 1]} : vector<3x512xf32> to vector<1x512xf32>
      %72 = vector.extract_strided_slice %69 {offsets = [2, 0], sizes = [1, 512], strides = [1, 1]} : vector<3x512xf32> to vector<1x512xf32>
      %73 = arith.subf %51, %49 : vector<1x512xf32>
      %74 = arith.mulf %73, %70 : vector<1x512xf32>
      %75 = arith.addf %55, %74 : vector<1x512xf32>
      %76 = arith.mulf %51, %71 : vector<1x512xf32>
      %77 = arith.subf %75, %76 : vector<1x512xf32>
      %78 = arith.mulf %53, %72 : vector<1x512xf32>
      %79 = arith.subf %57, %78 : vector<1x512xf32>
      %80 = vector.broadcast %arg18 : i32 to vector<1x8xi32>
      %81 = arith.cmpi eq, %37, %80 : vector<1x8xi32>
      %82 = arith.extui %81 : vector<1x8xi1> to vector<1x8xi32>
      %83 = arith.sitofp %82 : vector<1x8xi32> to vector<1x8xf32>
      %84 = vector.broadcast %83 : vector<1x8xf32> to vector<64x8xf32>
      %85 = arith.mulf %36, %84 : vector<64x8xf32>
      %cst_56 = arith.constant dense<0.000000e+00> : vector<64xf32>
      %86 = vector.multi_reduction <add>, %85, %cst_56 [1] : vector<64x8xf32> to vector<64xf32>
      %87 = vector.shape_cast %86 : vector<64xf32> to vector<64x1xf32>
      %88 = vector.extract_strided_slice %87 {offsets = [0, 0], sizes = [32, 1], strides = [1, 1]} : vector<64x1xf32> to vector<32x1xf32>
      %89 = vector.extract_strided_slice %87 {offsets = [32, 0], sizes = [32, 1], strides = [1, 1]} : vector<64x1xf32> to vector<32x1xf32>
      %90 = vector.broadcast %88 : vector<32x1xf32> to vector<32x512xf32>
      %91 = vector.broadcast %77 : vector<1x512xf32> to vector<32x512xf32>
      %92 = arith.mulf %90, %91 : vector<32x512xf32>
      %93 = vector.broadcast %89 : vector<32x1xf32> to vector<32x512xf32>
      %94 = vector.broadcast %79 : vector<1x512xf32> to vector<32x512xf32>
      %95 = arith.mulf %93, %94 : vector<32x512xf32>
      %96 = arith.addf %92, %95 : vector<32x512xf32>
      %cst_57 = arith.constant -1.000000e+00 : f32
      %cst_58 = arith.constant 1.000000e+00 : f32
      %97 = vector.broadcast %cst_57 : f32 to vector<32x512xf32>
      %98 = arith.maximumf %97, %96 : vector<32x512xf32>
      %99 = vector.broadcast %cst_58 : f32 to vector<32x512xf32>
      %100 = arith.minimumf %99, %98 : vector<32x512xf32>
      %101 = arith.addf %arg19, %100 : vector<32x512xf32>
      scf.yield %101 : vector<32x512xf32>
    }
    %c8_i32_38 = arith.constant 8 : i32
    %c0_39 = arith.constant 0 : index
    %c0_40 = arith.constant 0 : index
    %c0_41 = arith.constant 0 : index
    %41 = vector.load %arg10[%c0_39, %c0_40, %c0_41] : memref<1x32x512xf32, #tpu.memory_space<vmem>>, vector<1x32x512xf32>
    %42 = vector.shape_cast %41 : vector<1x32x512xf32> to vector<32x512xf32>
    %43 = vector.shape_cast %40 : vector<32x512xf32> to vector<1x32x512xf32>
    tpu.vector_store %arg10[%c0_39, %c0_40, %c0_41], %43 {strides = array<i32>} : memref<1x32x512xf32, #tpu.memory_space<vmem>>, vector<1x32x512xf32>,
    return
  }
  func.func @transform_0(%arg0: i32) -> (i32, i32, i32) {
    %c0_i32 = arith.constant 0 : i32
    %c0_i32_0 = arith.constant 0 : i32
    %c0_i32_1 = arith.constant 0 : i32
    return %arg0, %c0_i32, %c0_i32_0 : i32, i32, i32
  }
  func.func @transform_1(%arg0: i32) -> (i32, i32, i32) {
    %c0_i32 = arith.constant 0 : i32
    %c0_i32_0 = arith.constant 0 : i32
    %c0_i32_1 = arith.constant 0 : i32
    return %arg0, %c0_i32, %c0_i32_0 : i32, i32, i32
  }
  func.func @transform_2(%arg0: i32) -> (i32, i32) {
    %c0_i32 = arith.constant 0 : i32
    %c0_i32_0 = arith.constant 0 : i32
    %c0_i32_1 = arith.constant 0 : i32
    return %c0_i32, %c0_i32_0 : i32, i32
  }
  func.func @transform_3(%arg0: i32) -> (i32, i32) {
    %c0_i32 = arith.constant 0 : i32
    %c0_i32_0 = arith.constant 0 : i32
    %c0_i32_1 = arith.constant 0 : i32
    return %c0_i32, %c0_i32_0 : i32, i32
  }
  func.func @transform_4(%arg0: i32) -> (i32, i32) {
    %c0_i32 = arith.constant 0 : i32
    %c0_i32_0 = arith.constant 0 : i32
    %c0_i32_1 = arith.constant 0 : i32
    return %c0_i32, %c0_i32_0 : i32, i32
  }
  func.func @transform_5(%arg0: i32) -> (i32, i32) {
    %c0_i32 = arith.constant 0 : i32
    %c0_i32_0 = arith.constant 0 : i32
    %c0_i32_1 = arith.constant 0 : i32
    return %c0_i32, %c0_i32_0 : i32, i32
  }
  func.func @transform_6(%arg0: i32) -> (i32, i32) {
    %c0_i32 = arith.constant 0 : i32
    %c0_i32_0 = arith.constant 0 : i32
    %c0_i32_1 = arith.constant 0 : i32
    return %c0_i32, %c0_i32_0 : i32, i32
  }
  func.func @transform_7(%arg0: i32) -> (i32, i32) {
    %c0_i32 = arith.constant 0 : i32
    %c0_i32_0 = arith.constant 0 : i32
    %c0_i32_1 = arith.constant 0 : i32
    return %c0_i32, %c0_i32_0 : i32, i32
  }
  func.func @transform_8(%arg0: i32) -> (i32, i32) {
    %c0_i32 = arith.constant 0 : i32
    %c0_i32_0 = arith.constant 0 : i32
    %c0_i32_1 = arith.constant 0 : i32
    return %c0_i32, %c0_i32_0 : i32, i32
  }
  func.func @transform_9(%arg0: i32) -> (i32, i32, i32) {
    %c0_i32 = arith.constant 0 : i32
    %c0_i32_0 = arith.constant 0 : i32
    %c0_i32_1 = arith.constant 0 : i32
    return %arg0, %c0_i32, %c0_i32_0 : i32, i32, i32
  }
}

</mosaic_0001>

<llo_original>
// kernel: tpu_custom_call.1
$region0: #{tpu_custom_call.1}
  #allocation0 [shape = 'u32[]', space=smem, size = 0x4, offset = 0x4, fixed_abs, tag = 'smem constant byte address 0x4 - core index']
  #allocation1 [shape = 'u32[144,128]{1,0:T(1,128)}', space=vmem, size = 0x12000, scoped, tag = 'internal scratch']
  #allocation2 [shape = 'f32[8,32]{1,0:T(8,128)}', space=vmem, size = 0x1000, scoped, tag = 'scratch operand']
  #allocation3 [shape = 'f32[8,32]{1,0:T(8,128)}', space=vmem, size = 0x1000, scoped, tag = 'scratch operand']
  #allocation4 [shape = 'f32[8,512]{1,0:T(8,128)}', space=vmem, size = 0x4000, scoped, tag = 'scratch operand']
  #allocation5 [shape = 'f32[8,512]{1,0:T(8,128)}', space=vmem, size = 0x4000, scoped, tag = 'scratch operand']
  #allocation6 [shape = 'f32[8,512]{1,0:T(8,128)}', space=vmem, size = 0x4000, scoped, tag = 'scratch operand']
  #allocation7 [shape = 'f32[8,512]{1,0:T(8,128)}', space=vmem, size = 0x4000, scoped, tag = 'scratch operand']
  #allocation8 [shape = 'f32[8,512]{1,0:T(8,128)}', space=vmem, size = 0x4000, scoped, tag = 'scratch operand']
  %s0 = inlined_call_operand.vmem [shape: f32[2,8,160], index: 0, kind: input, shape index: {}]
  %s1 = inlined_call_operand.vmem [shape: f32[2,160,8], index: 1, kind: input, shape index: {}]
  %s2 = inlined_call_operand.vmem [shape: f32[160,128], index: 2, kind: input, shape index: {}]
  %s3 = inlined_call_operand.vmem [shape: f32[1,128], index: 3, kind: input, shape index: {}]
  %s4 = inlined_call_operand.vmem [shape: f32[64,160], index: 4, kind: input, shape index: {}]
  %s5 = inlined_call_operand.vmem [shape: f32[64,1], index: 5, kind: input, shape index: {}]
  %s6 = inlined_call_operand.vmem [shape: f32[16,512], index: 6, kind: input, shape index: {}]
  %s7 = inlined_call_operand.vmem [shape: f32[32,512], index: 7, kind: input, shape index: {}]
  %s8 = inlined_call_operand.vmem [shape: f32[512,32], index: 8, kind: input, shape index: {}]
  %s9 = inlined_call_operand.hbm [shape: f32[2,32,512], index: 9, kind: output, shape index: {}]
  %s10 = sld [smem:[#allocation0]]
  $region76: #{tpu_custom_call.1} parent=0
    _
  %s12 = ssub.s32 1, %s10
  %s13 = scalar_select 0, %s12, %s10
  $region1: #{tpu_custom_call.1} parent=0
    #allocation9 [shape = 'u8[131072]{0}', space=vmem, size = 0x20000, scoped, tag = 'output window, operand 0']
    #allocation10 [shape = 's32[2]{0}', space=sflag, size = 0x8, scoped, tag = 'scoped memory for tpu_custom_call.1']
    %14 = vsyncpa [#allocation10], 0
    %s15 = scalar_lea.sflag [#allocation10], 1
    %16 = vsyncpa %s15, 0
    loop: start=0, step=1, limit=4
    $region2: #{tpu_custom_call.1} parent=1 // loop_pre_header
      _
    $region3: #{tpu_custom_call.1} parent=1 // loop_header
      %s18 = sphi 0, %s22
      %p19 = scmp.ge.s32.totalorder %s18, 4
      %s28 = sphi 0, %s30
      %s31 = sphi 0, %s28
      %s32 = sphi 0, %s31
      %s48 = sphi 0, %s32
      %s54 = sphi 0, %s56
      %s57 = sphi 0, %s54
      %s58 = sphi 0, %s57
      %s74 = sphi 0, %s58
      %s78 = sphi 0, %s78
      %s80 = sphi 0, %s78
      %s81 = sphi 0, %s80
      %s95 = sphi 0, %s81
      %s99 = sphi 0, %s99
      %s101 = sphi 0, %s99
      %s102 = sphi 0, %s101
      %s116 = sphi 0, %s102
      %s120 = sphi 0, %s120
      %s122 = sphi 0, %s120
      %s123 = sphi 0, %s122
      %s137 = sphi 0, %s123
      %s141 = sphi 0, %s141
      %s143 = sphi 0, %s141
      %s144 = sphi 0, %s143
      %s158 = sphi 0, %s144
      %s162 = sphi 0, %s162
      %s164 = sphi 0, %s162
      %s165 = sphi 0, %s164
      %s179 = sphi 0, %s165
      %s183 = sphi 0, %s183
      %s185 = sphi 0, %s183
      %s186 = sphi 0, %s185
      %s200 = sphi 0, %s186
      %s204 = sphi 0, %s204
      %s206 = sphi 0, %s204
      %s207 = sphi 0, %s206
      %s221 = sphi 0, %s207
      %s227 = sphi 0, %s229
      %s230 = sphi 0, %s227
      %s231 = sphi 0, %s230
      %s247 = sphi 0, %s231
    $region4: #{tpu_custom_call.1} parent=1 // loop_header_branch
      %21 = sbr.rel (%p19) target = $region8
    $region5: #{tpu_custom_call.1} parent=1 // loop_body
      %s23 = ssub.s32 %s18, 1
      %s24 = ssub.s32 %s18, 2
      %s25 = sadd.s32 %s18, 1
      %s26 = ssub.s32 %s18, %s25
      %p27 = scmp.eq.s32.totalorder %s26, 0
      %s29 = sadd.s32 %s28, 1
      %s30 = scalar_select %p27, %s28, %s29
      %p33 = pneg %p27
      %p34 = scmp.eq.s32.totalorder %s18, 1
      %p35 = por %p33, %p34
      %p36 = scmp.ne.s32.totalorder %s28, %s31
      %p37 = scmp.eq.s32.totalorder %s18, 0
      %p38 = por %p36, %p37
      %p39 = scmp.ne.s32.totalorder %s28, %s31
      %p40 = scmp.eq.s32.totalorder %s23, 1
      %p41 = por %p39, %p40
      %p42 = scmp.ne.s32.totalorder %s31, %s32
      %p43 = scmp.eq.s32.totalorder %s23, 0
      %p44 = por %p42, %p43
      %p45 = scmp.ne.s32.totalorder %s31, %s32
      %p46 = scmp.eq.s32.totalorder %s24, 1
      %p47 = por %p45, %p46
      %p49 = scmp.ne.s32.totalorder %s32, %s48
      %p50 = scmp.eq.s32.totalorder %s24, 0
      %p51 = por %p49, %p50
      %s52 = ssub.s32 %s18, %s25
      %p53 = scmp.eq.s32.totalorder %s52, 0
      %s55 = sadd.s32 %s54, 1
      %s56 = scalar_select %p53, %s54, %s55
      %p59 = pneg %p53
      %p60 = scmp.eq.s32.totalorder %s18, 1
      %p61 = por %p59, %p60
      %p62 = scmp.ne.s32.totalorder %s54, %s57
      %p63 = scmp.eq.s32.totalorder %s18, 0
      %p64 = por %p62, %p63
      %p65 = scmp.ne.s32.totalorder %s54, %s57
      %p66 = scmp.eq.s32.totalorder %s23, 1
      %p67 = por %p65, %p66
      %p68 = scmp.ne.s32.totalorder %s57, %s58
      %p69 = scmp.eq.s32.totalorder %s23, 0
      %p70 = por %p68, %p69
      %p71 = scmp.ne.s32.totalorder %s57, %s58
      %p72 = scmp.eq.s32.totalorder %s24, 1
      %p73 = por %p71, %p72
      %p75 = scmp.ne.s32.totalorder %s58, %s74
      %p76 = scmp.eq.s32.totalorder %s24, 0
      %p77 = por %p75, %p76
      %s79 = sadd.s32 %s78, 1
      %p82 = scmp.eq.s32.totalorder %s18, 1
      %p83 = scmp.ne.s32.totalorder %s78, %s80
      %p84 = scmp.eq.s32.totalorder %s18, 0
      %p85 = por %p83, %p84
      %p86 = scmp.ne.s32.totalorder %s78, %s80
      %p87 = scmp.eq.s32.totalorder %s23, 1
      %p88 = por %p86, %p87
      %p89 = scmp.ne.s32.totalorder %s80, %s81
      %p90 = scmp.eq.s32.totalorder %s23, 0
      %p91 = por %p89, %p90
      %p92 = scmp.ne.s32.totalorder %s80, %s81
      %p93 = scmp.eq.s32.totalorder %s24, 1
      %p94 = por %p92, %p93
      %p96 = scmp.ne.s32.totalorder %s81, %s95
      %p97 = scmp.eq.s32.totalorder %s24, 0
      %p98 = por %p96, %p97
      %s100 = sadd.s32 %s99, 1
      %p103 = scmp.eq.s32.totalorder %s18, 1
      %p104 = scmp.ne.s32.totalorder %s99, %s101
      %p105 = scmp.eq.s32.totalorder %s18, 0
      %p106 = por %p104, %p105
      %p107 = scmp.ne.s32.totalorder %s99, %s101
      %p108 = scmp.eq.s32.totalorder %s23, 1
      %p109 = por %p107, %p108
      %p110 = scmp.ne.s32.totalorder %s101, %s102
      %p111 = scmp.eq.s32.totalorder %s23, 0
      %p112 = por %p110, %p111
      %p113 = scmp.ne.s32.totalorder %s101, %s102
      %p114 = scmp.eq.s32.totalorder %s24, 1
      %p115 = por %p113, %p114
      %p117 = scmp.ne.s32.totalorder %s102, %s116
      %p118 = scmp.eq.s32.totalorder %s24, 0
      %p119 = por %p117, %p118
      %s121 = sadd.s32 %s120, 1
      %p124 = scmp.eq.s32.totalorder %s18, 1
      %p125 = scmp.ne.s32.totalorder %s120, %s122
      %p126 = scmp.eq.s32.totalorder %s18, 0
      %p127 = por %p125, %p126
      %p128 = scmp.ne.s32.totalorder %s120, %s122
      %p129 = scmp.eq.s32.totalorder %s23, 1
      %p130 = por %p128, %p129
      %p131 = scmp.ne.s32.totalorder %s122, %s123
      %p132 = scmp.eq.s32.totalorder %s23, 0
      %p133 = por %p131, %p132
      %p134 = scmp.ne.s32.totalorder %s122, %s123
      %p135 = scmp.eq.s32.totalorder %s24, 1
      %p136 = por %p134, %p135
      %p138 = scmp.ne.s32.totalorder %s123, %s137
      %p139 = scmp.eq.s32.totalorder %s24, 0
      %p140 = por %p138, %p139
      %s142 = sadd.s32 %s141, 1
      %p145 = scmp.eq.s32.totalorder %s18, 1
      %p146 = scmp.ne.s32.totalorder %s141, %s143
      %p147 = scmp.eq.s32.totalorder %s18, 0
      %p148 = por %p146, %p147
      %p149 = scmp.ne.s32.totalorder %s141, %s143
      %p150 = scmp.eq.s32.totalorder %s23, 1
      %p151 = por %p149, %p150
      %p152 = scmp.ne.s32.totalorder %s143, %s144
      %p153 = scmp.eq.s32.totalorder %s23, 0
      %p154 = por %p152, %p153
      %p155 = scmp.ne.s32.totalorder %s143, %s144
      %p156 = scmp.eq.s32.totalorder %s24, 1
      %p157 = por %p155, %p156
      %p159 = scmp.ne.s32.totalorder %s144, %s158
      %p160 = scmp.eq.s32.totalorder %s24, 0
      %p161 = por %p159, %p160
      %s163 = sadd.s32 %s162, 1
      %p166 = scmp.eq.s32.totalorder %s18, 1
      %p167 = scmp.ne.s32.totalorder %s162, %s164
      %p168 = scmp.eq.s32.totalorder %s18, 0
      %p169 = por %p167, %p168
      %p170 = scmp.ne.s32.totalorder %s162, %s164
      %p171 = scmp.eq.s32.totalorder %s23, 1
      %p172 = por %p170, %p171
      %p173 = scmp.ne.s32.totalorder %s164, %s165
      %p174 = scmp.eq.s32.totalorder %s23, 0
      %p175 = por %p173, %p174
      %p176 = scmp.ne.s32.totalorder %s164, %s165
      %p177 = scmp.eq.s32.totalorder %s24, 1
      %p178 = por %p176, %p177
      %p180 = scmp.ne.s32.totalorder %s165, %s179
      %p181 = scmp.eq.s32.totalorder %s24, 0
      %p182 = por %p180, %p181
      %s184 = sadd.s32 %s183, 1
      %p187 = scmp.eq.s32.totalorder %s18, 1
      %p188 = scmp.ne.s32.totalorder %s183, %s185
      %p189 = scmp.eq.s32.totalorder %s18, 0
      %p190 = por %p188, %p189
      %p191 = scmp.ne.s32.totalorder %s183, %s185
      %p192 = scmp.eq.s32.totalorder %s23, 1
      %p193 = por %p191, %p192
      %p194 = scmp.ne.s32.totalorder %s185, %s186
      %p195 = scmp.eq.s32.totalorder %s23, 0
      %p196 = por %p194, %p195
      %p197 = scmp.ne.s32.totalorder %s185, %s186
      %p198 = scmp.eq.s32.totalorder %s24, 1
      %p199 = por %p197, %p198
      %p201 = scmp.ne.s32.totalorder %s186, %s200
      %p202 = scmp.eq.s32.totalorder %s24, 0
      %p203 = por %p201, %p202
      %s205 = sadd.s32 %s204, 1
      %p208 = scmp.eq.s32.totalorder %s18, 1
      %p209 = scmp.ne.s32.totalorder %s204, %s206
      %p210 = scmp.eq.s32.totalorder %s18, 0
      %p211 = por %p209, %p210
      %p212 = scmp.ne.s32.totalorder %s204, %s206
      %p213 = scmp.eq.s32.totalorder %s23, 1
      %p214 = por %p212, %p213
      %p215 = scmp.ne.s32.totalorder %s206, %s207
      %p216 = scmp.eq.s32.totalorder %s23, 0
      %p217 = por %p215, %p216
      %p218 = scmp.ne.s32.totalorder %s206, %s207
      %p219 = scmp.eq.s32.totalorder %s24, 1
      %p220 = por %p218, %p219
      %p222 = scmp.ne.s32.totalorder %s207, %s221
      %p223 = scmp.eq.s32.totalorder %s24, 0
      %p224 = por %p222, %p223
      %s225 = ssub.s32 %s18, %s25
      %p226 = scmp.eq.s32.totalorder %s225, 0
      %s228 = sadd.s32 %s227, 1
      %s229 = scalar_select %p226, %s227, %s228
      %p232 = pneg %p226
      %p233 = scmp.eq.s32.totalorder %s18, 1
      %p234 = por %p232, %p233
      %p235 = scmp.ne.s32.totalorder %s227, %s230
      %p236 = scmp.eq.s32.totalorder %s18, 0
      %p237 = por %p235, %p236
      %p238 = scmp.ne.s32.totalorder %s227, %s230
      %p239 = scmp.eq.s32.totalorder %s23, 1
      %p240 = por %p238, %p239
      %p241 = scmp.ne.s32.totalorder %s230, %s231
      %p242 = scmp.eq.s32.totalorder %s23, 0
      %p243 = por %p241, %p242
      %p244 = scmp.ne.s32.totalorder %s230, %s231
      %p245 = scmp.eq.s32.totalorder %s24, 1
      %p246 = por %p244, %p245
      %p248 = scmp.ne.s32.totalorder %s231, %s247
      %p249 = scmp.eq.s32.totalorder %s24, 0
      %p250 = por %p248, %p249
      %p251 = scmp.le.s32.totalorder 1, %s18
      %p252 = scmp.lt.s32.totalorder %s18, 3
      %p253 = pnand %p251, %p252
      %p254 = pneg %p253
      // Predicated region
      $region9: #{tpu_custom_call.1} parent=5 // pred_check
        _
      $region10: #{tpu_custom_call.1} parent=5 // pred_check_branch
        %256 = sbr.rel (%p253) target = $region12
      $region11: #{tpu_custom_call.1} parent=5 // pred_region
        %s257 = ssub.s32 %s18, 1
        // Predicated region
        $region13: #{tpu_custom_call.1} parent=11 // pred_check
          %p258 = pneg %p91
        $region14: #{tpu_custom_call.1} parent=11 // pred_check_branch
          %260 = sbr.rel (%p258) target = $region16
        $region15: #{tpu_custom_call.1} parent=11 // pred_region
          _
        $region16: #{tpu_custom_call.1} parent=11 // pred_fallthru
          _
        // Predicated region
        $region17: #{tpu_custom_call.1} parent=11 // pred_check
          %p261 = pneg %p112
        $region18: #{tpu_custom_call.1} parent=11 // pred_check_branch
          %263 = sbr.rel (%p261) target = $region20
        $region19: #{tpu_custom_call.1} parent=11 // pred_region
          _
        $region20: #{tpu_custom_call.1} parent=11 // pred_fallthru
          _
        // Predicated region
        $region21: #{tpu_custom_call.1} parent=11 // pred_check
          %p264 = pneg %p133
        $region22: #{tpu_custom_call.1} parent=11 // pred_check_branch
          %266 = sbr.rel (%p264) target = $region24
        $region23: #{tpu_custom_call.1} parent=11 // pred_region
          _
        $region24: #{tpu_custom_call.1} parent=11 // pred_fallthru
          _
        // Predicated region
        $region25: #{tpu_custom_call.1} parent=11 // pred_check
          %p267 = pneg %p154
        $region26: #{tpu_custom_call.1} parent=11 // pred_check_branch
          %269 = sbr.rel (%p267) target = $region28
        $region27: #{tpu_custom_call.1} parent=11 // pred_region
          _
        $region28: #{tpu_custom_call.1} parent=11 // pred_fallthru
          _
        // Predicated region
        $region29: #{tpu_custom_call.1} parent=11 // pred_check
          %p270 = pneg %p175
        $region30: #{tpu_custom_call.1} parent=11 // pred_check_branch
          %272 = sbr.rel (%p270) target = $region32
        $region31: #{tpu_custom_call.1} parent=11 // pred_region
          _
        $region32: #{tpu_custom_call.1} parent=11 // pred_fallthru
          _
        // Predicated region
        $region33: #{tpu_custom_call.1} parent=11 // pred_check
          %p273 = pneg %p196
        $region34: #{tpu_custom_call.1} parent=11 // pred_check_branch
          %275 = sbr.rel (%p273) target = $region36
        $region35: #{tpu_custom_call.1} parent=11 // pred_region
          _
        $region36: #{tpu_custom_call.1} parent=11 // pred_fallthru
          _
        // Predicated region
        $region37: #{tpu_custom_call.1} parent=11 // pred_check
          %p276 = pneg %p217
        $region38: #{tpu_custom_call.1} parent=11 // pred_check_branch
          %278 = sbr.rel (%p276) target = $region40
        $region39: #{tpu_custom_call.1} parent=11 // pred_region
          _
        $region40: #{tpu_custom_call.1} parent=11 // pred_fallthru
          _
      $region12: #{tpu_custom_call.1} parent=5 // pred_fallthru
        _
      %p279 = scmp.lt.s32.totalorder %s18, 2
      // Predicated region
      $region41: #{tpu_custom_call.1} parent=5 // pred_check
        %p280 = pneg %p279
      $region42: #{tpu_custom_call.1} parent=5 // pred_check_branch
        %282 = sbr.rel (%p280) target = $region44
      $region43: #{tpu_custom_call.1} parent=5 // pred_region
        // Predicated region
        $region45: #{tpu_custom_call.1} parent=43 // pred_check
          %p283 = pneg %p38
        $region46: #{tpu_custom_call.1} parent=43 // pred_check_branch
          %285 = sbr.rel (%p283) target = $region48
        $region47: #{tpu_custom_call.1} parent=43 // pred_region
          %p286 = scmp.lt.s32.totalorder %s18, 1
          %s287 = scalar_select %p286, %s18, 1
          %s288 = smul.addr %s287, 2
          %s289 = smul.addr %s288, 8
          %s290 = scalar_lea.vmem %s0, %s289
        $region48: #{tpu_custom_call.1} parent=43 // pred_fallthru
          _
        // Predicated region
        $region49: #{tpu_custom_call.1} parent=43 // pred_check
          %p291 = pneg %p64
        $region50: #{tpu_custom_call.1} parent=43 // pred_check_branch
          %293 = sbr.rel (%p291) target = $region52
        $region51: #{tpu_custom_call.1} parent=43 // pred_region
          %p294 = scmp.lt.s32.totalorder %s18, 1
          %s295 = scalar_select %p294, %s18, 1
          %s296 = smul.addr %s295, 20
          %s297 = smul.addr %s296, 8
          %s298 = scalar_lea.vmem %s1, %s297
        $region52: #{tpu_custom_call.1} parent=43 // pred_fallthru
          _
      $region44: #{tpu_custom_call.1} parent=5 // pred_fallthru
        _
      %p299 = scmp.le.s32.totalorder 1, %s18
      %p300 = scmp.lt.s32.totalorder %s18, 3
      %p301 = pnand %p299, %p300
      %p302 = pneg %p301
      // Predicated region
      $region53: #{tpu_custom_call.1} parent=5 // pred_check
        _
      $region54: #{tpu_custom_call.1} parent=5 // pred_check_branch
        %304 = sbr.rel (%p301) target = $region56
      $region55: #{tpu_custom_call.1} parent=5 // pred_region
        %s305 = ssub.s32 %s18, 1
        %p306 = scmp.lt.s32.totalorder %s23, 1
        %s307 = scalar_select %p306, %s23, 1
        %s308 = smul.addr %s307, 2
        %s309 = smul.addr %s308, 8
        %s310 = scalar_lea.vmem %s0, %s309
        %p311 = pneg %p44
        %p312 = pneg %p41
        %p313 = scmp.lt.s32.totalorder %s23, 1
        %s314 = scalar_select %p313, %s23, 1
        %s315 = smul.addr %s314, 20
        %s316 = smul.addr %s315, 8
        %s317 = scalar_lea.vmem %s1, %s316
        %p318 = pneg %p70
        %p319 = pneg %p67
        %p320 = pneg %p91
        %p321 = pneg %p88
        %p322 = pneg %p112
        %p323 = pneg %p109
        %p324 = pneg %p133
        %p325 = pneg %p130
        %p326 = pneg %p154
        %p327 = pneg %p151
        %p328 = pneg %p175
        %p329 = pneg %p172
        %p330 = pneg %p196
        %p331 = pneg %p193
        %p332 = pneg %p217
        %p333 = pneg %p214
        %p334 = pneg %p243
        %p335 = pneg %p240
        %s336 = sand.u32 %s230, 1
        %s337 = scalar_lea.sflag [#allocation10], %s336
        %s338 = sand.u32 %s230, 1
        %s339 = smul.addr %s338, 128
        %s340 = scalar_lea.vmem [#allocation9], %s339
        %p341 = scmp.lt.s32.totalorder %s23, 1
        %s342 = scalar_select %p341, %s23, 1
        %s343 = smul.addr %s342, 2
        %s344 = smul.addr %s343, 8
        %s345 = scalar_lea.vmem %s0, %s344
        %p346 = scmp.lt.s32.totalorder %s23, 1
        %s347 = scalar_select %p346, %s23, 1
        %s348 = smul.addr %s347, 20
        %s349 = smul.addr %s348, 8
        %s350 = scalar_lea.vmem %s1, %s349
        %v351 = vld [vmem:[%s345] sm:$0xff]
        %v352 = vld [vmem:[%s345 + $0x8] sm:$0xff]
        %v353 = vld [vmem:[%s2] sm:$0xff]
        %v354 = vld [vmem:[%s2 + $0x8] sm:$0xff]
        %v355 = vld [vmem:[%s2 + $0x10] sm:$0xff]
        %v356 = vld [vmem:[%s2 + $0x18] sm:$0xff]
        %v357 = vld [vmem:[%s2 + $0x20] sm:$0xff]
        %v358 = vld [vmem:[%s2 + $0x28] sm:$0xff]
        %v359 = vld [vmem:[%s2 + $0x30] sm:$0xff]
        %v360 = vld [vmem:[%s2 + $0x38] sm:$0xff]
        %v361 = vld [vmem:[%s2 + $0x40] sm:$0xff]
        %v362 = vld [vmem:[%s2 + $0x48] sm:$0xff]
        %v363 = vld [vmem:[%s2 + $0x50] sm:$0xff]
        %v364 = vld [vmem:[%s2 + $0x58] sm:$0xff]
        %v365 = vld [vmem:[%s2 + $0x60] sm:$0xff]
        %v366 = vld [vmem:[%s2 + $0x68] sm:$0xff]
        %v367 = vld [vmem:[%s2 + $0x70] sm:$0xff]
        %v368 = vld [vmem:[%s2 + $0x78] sm:$0xff]
        %v369 = vld [vmem:[%s2 + $0x80] sm:$0xff]
        %v370 = vld [vmem:[%s2 + $0x88] sm:$0xff]
        %v371 = vld [vmem:[%s2 + $0x90] sm:$0xff]
        %v372 = vld [vmem:[%s2 + $0x98] sm:$0xff]
        %v373 = vld [vmem:[%s3] sm:$0x1]
        %v375 = vlaneseq
        %v376 = vshrl.u32 %v375, 7
        %v377 = vsub.s32 0, %v376
        %v378 = vrot.slane %v373, %v377
        %vm380 = vcmask 261120
        %v382 = vsel %vm380, %v352, 0
        %384 = vmatprep.subr.mxu0 0.0
        %385 = vmatpush1.msra.mxu0 %v353
        %386 = vmatprep.subr.mxu0 0.0
        %387 = vmatpush1.msra.mxu0 %v354
        %388 = vmatprep.subr.mxu0 0.0
        %389 = vmatpush1.msra.mxu0 %v355
        %390 = vmatprep.subr.mxu0 0.0
        %391 = vmatpush1.msra.mxu0 %v356
        %392 = vmatprep.subr.mxu0 0.0
        %393 = vmatpush1.msra.mxu0 %v357
        %394 = vmatprep.subr.mxu0 0.0
        %395 = vmatpush1.msra.mxu0 %v358
        %396 = vmatprep.subr.mxu0 0.0
        %397 = vmatpush1.msra.mxu0 %v359
        %398 = vmatprep.subr.mxu0 0.0
        %399 = vmatpush1.msra.mxu0 %v360
        %400 = vmatprep.subr.mxu0 0.0
        %401 = vmatpush1.msra.mxu0 %v361
        %402 = vmatprep.subr.mxu0 0.0
        %403 = vmatpush1.msra.mxu0 %v362
        %404 = vmatprep.subr.mxu0 0.0
        %405 = vmatpush1.msra.mxu0 %v363
        %406 = vmatprep.subr.mxu0 0.0
        %407 = vmatpush1.msra.mxu0 %v364
        %408 = vmatprep.subr.mxu0 0.0
        %409 = vmatpush1.msra.mxu0 %v365
        %410 = vmatprep.subr.mxu0 0.0
        %411 = vmatpush1.msra.mxu0 %v366
        %412 = vmatprep.subr.mxu0 0.0
        %413 = vmatpush1.msra.mxu0 %v367
        %414 = vmatprep.subr.mxu0 0.0
        %415 = vmatpush1.msra.mxu0 %v368
        %416 = vmatprep.subr.mxu0 0.0
        %417 = vmatpush1.msra.mxu0 %v369
        %418 = vmatprep.subr.mxu0 0.0
        %419 = vmatpush1.msra.mxu0 %v370
        %420 = vmatprep.subr.mxu0 0.0
        %421 = vmatpush1.msra.mxu0 %v371
        %422 = vmatprep.subr.mxu0 0.0
        %423 = vmatpush1.msra.mxu0 %v372
        %424 = vmatprep.subr.mxu0 0.0
        %425 = vmatpush1.msra.mxu0 0.0
        %426 = vmatprep.subr.mxu0 0.0
        %427 = vmatpush1.msra.mxu0 0.0
        %428 = vmatprep.subr.mxu0 0.0
        %429 = vmatpush1.msra.mxu0 0.0
        %430 = vmatprep.subr.mxu0 0.0
        %431 = vmatpush1.msra.mxu0 0.0
        %432 = vmatprep.subr.mxu0 0.0
        %433 = vmatpush1.msra.mxu0 0.0
        %434 = vmatprep.subr.mxu0 0.0
        %435 = vmatpush1.msra.mxu0 0.0
        %436 = vmatprep.subr.mxu0 0.0
        %437 = vmatpush1.msra.mxu0 0.0
        %438 = vmatprep.subr.mxu0 0.0
        %439 = vmatpush1.msra.mxu0 0.0
        %440 = vmatprep.subr.mxu0 0.0
        %441 = vmatpush1.msra.mxu0 0.0
        %442 = vmatprep.subr.mxu0 0.0
        %443 = vmatpush1.msra.mxu0 0.0
        %444 = vmatprep.subr.mxu0 0.0
        %445 = vmatpush1.msra.mxu0 0.0
        %446 = vmatprep.subr.mxu0 0.0
        %447 = vmatpush1.msra.mxu0 0.0
        %448 = vmatprep.mubr.f32.mxu0 %v382
        %449 = vmatmul.mubr.f32.gmra.mrb[0].mxu0 %v351
        %v450 = vpop.f32.mrb[0].mxu0
        %v451 = vadd.f32 %v378, %v450
        %v452 = vpop.f32.mrb[0].mxu0
        %453 = vdwg.mxu0
        %v454 = vtanh.pop %v451
        %v455 = vld [vmem:[%s6] sm:$0xff]
        %v456 = vld [vmem:[%s6 + $0x8] sm:$0xff]
        %v457 = vld [vmem:[%s6 + $0x10] sm:$0xff]
        %v458 = vld [vmem:[%s6 + $0x18] sm:$0xff]
        %v459 = vld [vmem:[%s6 + $0x20] sm:$0xff]
        %v460 = vld [vmem:[%s6 + $0x28] sm:$0xff]
        %v461 = vld [vmem:[%s6 + $0x30] sm:$0xff]
        %v462 = vld [vmem:[%s6 + $0x38] sm:$0xff]
        %v463 = vld [vmem:[%s7] sm:$0xff]
        %v464 = vld [vmem:[%s7 + $0x8] sm:$0xff]
        %v465 = vld [vmem:[%s7 + $0x10] sm:$0xff]
        %v466 = vld [vmem:[%s7 + $0x18] sm:$0xff]
        %v467 = vld [vmem:[%s7 + $0x20] sm:$0xff]
        %v468 = vld [vmem:[%s7 + $0x28] sm:$0xff]
        %v469 = vld [vmem:[%s7 + $0x30] sm:$0xff]
        %v470 = vld [vmem:[%s7 + $0x38] sm:$0xff]
        %v471 = vld [vmem:[%s7 + $0x40] sm:$0xff]
        %v472 = vld [vmem:[%s7 + $0x48] sm:$0xff]
        %v473 = vld [vmem:[%s7 + $0x50] sm:$0xff]
        %v474 = vld [vmem:[%s7 + $0x58] sm:$0xff]
        %v475 = vld [vmem:[%s7 + $0x60] sm:$0xff]
        %v476 = vld [vmem:[%s7 + $0x68] sm:$0xff]
        %v477 = vld [vmem:[%s7 + $0x70] sm:$0xff]
        %v478 = vld [vmem:[%s7 + $0x78] sm:$0xff]
        %480 = vrot.lane.b32.xlu0 %v454, 64
        %v481 = vpop.permute.xlu0 %480
        %vm482 = vcmask 130048
        %v483 = vsel %vm482, %v481, 0
        %485 = vmatprep.subr.mxu0 %v456
        %486 = vmatpush1.msra.mxu0 %v455
        %487 = vmatprep.subr.mxu0 %v460
        %488 = vmatpush1.msra.mxu0 %v459
        %489 = vmatprep.subr.mxu0 0.0
        %490 = vmatpush1.msra.mxu0 0.0
        %491 = vmatprep.subr.mxu0 0.0
        %492 = vmatpush1.msra.mxu0 0.0
        %493 = vmatprep.subr.mxu0 0.0
        %494 = vmatpush1.msra.mxu0 0.0
        %495 = vmatprep.subr.mxu0 0.0
        %496 = vmatpush1.msra.mxu0 0.0
        %497 = vmatprep.subr.mxu0 0.0
        %498 = vmatpush1.msra.mxu0 0.0
        %499 = vmatprep.subr.mxu0 0.0
        %500 = vmatpush1.msra.mxu0 0.0
        %501 = vmatprep.subr.mxu0 0.0
        %502 = vmatpush1.msra.mxu0 0.0
        %503 = vmatprep.subr.mxu0 0.0
        %504 = vmatpush1.msra.mxu0 0.0
        %505 = vmatprep.subr.mxu0 0.0
        %506 = vmatpush1.msra.mxu0 0.0
        %507 = vmatprep.subr.mxu0 0.0
        %508 = vmatpush1.msra.mxu0 0.0
        %509 = vmatprep.subr.mxu0 0.0
        %510 = vmatpush1.msra.mxu0 0.0
        %511 = vmatprep.subr.mxu0 0.0
        %512 = vmatpush1.msra.mxu0 0.0
        %513 = vmatprep.subr.mxu0 0.0
        %514 = vmatpush1.msra.mxu0 0.0
        %515 = vmatprep.subr.mxu0 0.0
        %516 = vmatpush1.msra.mxu0 0.0
        %517 = vmatprep.subr.mxu0 0.0
        %518 = vmatpush1.msra.mxu0 0.0
        %519 = vmatprep.subr.mxu0 0.0
        %520 = vmatpush1.msra.mxu0 0.0
        %521 = vmatprep.subr.mxu0 0.0
        %522 = vmatpush1.msra.mxu0 0.0
        %523 = vmatprep.subr.mxu0 0.0
        %524 = vmatpush1.msra.mxu0 0.0
        %525 = vmatprep.subr.mxu0 0.0
        %526 = vmatpush1.msra.mxu0 0.0
        %527 = vmatprep.subr.mxu0 0.0
        %528 = vmatpush1.msra.mxu0 0.0
        %529 = vmatprep.subr.mxu0 0.0
        %530 = vmatpush1.msra.mxu0 0.0
        %531 = vmatprep.subr.mxu0 0.0
        %532 = vmatpush1.msra.mxu0 0.0
        %533 = vmatprep.subr.mxu0 0.0
        %534 = vmatpush1.msra.mxu0 0.0
        %535 = vmatprep.subr.mxu0 0.0
        %536 = vmatpush1.msra.mxu0 0.0
        %537 = vmatprep.subr.mxu0 0.0
        %538 = vmatpush1.msra.mxu0 0.0
        %539 = vmatprep.subr.mxu0 0.0
        %540 = vmatpush1.msra.mxu0 0.0
        %541 = vmatprep.subr.mxu0 0.0
        %542 = vmatpush1.msra.mxu0 0.0
        %543 = vmatprep.subr.mxu0 0.0
        %544 = vmatpush1.msra.mxu0 0.0
        %545 = vmatprep.subr.mxu0 0.0
        %546 = vmatpush1.msra.mxu0 0.0
        %547 = vmatprep.subr.mxu0 0.0
        %548 = vmatpush1.msra.mxu0 0.0
        %549 = vmatprep.mubr.f32.mxu0 0.0
        %550 = vmatmul.mubr.f32.gmra.mrb[0].mxu0 %v483
        %v551 = vpop.f32.mrb[0].mxu0
        %v552 = vadd.f32 0.0, %v551
        %v553 = vpop.f32.mrb[0].mxu0
        %v554 = vadd.f32 0.0, %v553
        %555 = vdwg.mxu0
        %556 = vmatprep.subr.mxu0 %v458
        %557 = vmatpush1.msra.mxu0 %v457
        %558 = vmatprep.subr.mxu0 %v462
        %559 = vmatpush1.msra.mxu0 %v461
        %560 = vmatprep.subr.mxu0 0.0
        %561 = vmatpush1.msra.mxu0 0.0
        %562 = vmatprep.subr.mxu0 0.0
        %563 = vmatpush1.msra.mxu0 0.0
        %564 = vmatprep.subr.mxu0 0.0
        %565 = vmatpush1.msra.mxu0 0.0
        %566 = vmatprep.subr.mxu0 0.0
        %567 = vmatpush1.msra.mxu0 0.0
        %568 = vmatprep.subr.mxu0 0.0
        %569 = vmatpush1.msra.mxu0 0.0
        %570 = vmatprep.subr.mxu0 0.0
        %571 = vmatpush1.msra.mxu0 0.0
        %572 = vmatprep.subr.mxu0 0.0
        %573 = vmatpush1.msra.mxu0 0.0
        %574 = vmatprep.subr.mxu0 0.0
        %575 = vmatpush1.msra.mxu0 0.0
        %576 = vmatprep.subr.mxu0 0.0
        %577 = vmatpush1.msra.mxu0 0.0
        %578 = vmatprep.subr.mxu0 0.0
        %579 = vmatpush1.msra.mxu0 0.0
        %580 = vmatprep.subr.mxu0 0.0
        %581 = vmatpush1.msra.mxu0 0.0
        %582 = vmatprep.subr.mxu0 0.0
        %583 = vmatpush1.msra.mxu0 0.0
        %584 = vmatprep.subr.mxu0 0.0
        %585 = vmatpush1.msra.mxu0 0.0
        %586 = vmatprep.subr.mxu0 0.0
        %587 = vmatpush1.msra.mxu0 0.0
        %588 = vmatprep.subr.mxu0 0.0
        %589 = vmatpush1.msra.mxu0 0.0
        %590 = vmatprep.subr.mxu0 0.0
        %591 = vmatpush1.msra.mxu0 0.0
        %592 = vmatprep.subr.mxu0 0.0
        %593 = vmatpush1.msra.mxu0 0.0
        %594 = vmatprep.subr.mxu0 0.0
        %595 = vmatpush1.msra.mxu0 0.0
        %596 = vmatprep.subr.mxu0 0.0
        %597 = vmatpush1.msra.mxu0 0.0
        %598 = vmatprep.subr.mxu0 0.0
        %599 = vmatpush1.msra.mxu0 0.0
        %600 = vmatprep.subr.mxu0 0.0
        %601 = vmatpush1.msra.mxu0 0.0
        %602 = vmatprep.subr.mxu0 0.0
        %603 = vmatpush1.msra.mxu0 0.0
        %604 = vmatprep.subr.mxu0 0.0
        %605 = vmatpush1.msra.mxu0 0.0
        %606 = vmatprep.subr.mxu0 0.0
        %607 = vmatpush1.msra.mxu0 0.0
        %608 = vmatprep.subr.mxu0 0.0
        %609 = vmatpush1.msra.mxu0 0.0
        %610 = vmatprep.subr.mxu0 0.0
        %611 = vmatpush1.msra.mxu0 0.0
        %612 = vmatprep.subr.mxu0 0.0
        %613 = vmatpush1.msra.mxu0 0.0
        %614 = vmatprep.subr.mxu0 0.0
        %615 = vmatpush1.msra.mxu0 0.0
        %616 = vmatprep.subr.mxu0 0.0
        %617 = vmatpush1.msra.mxu0 0.0
        %618 = vmatprep.subr.mxu0 0.0
        %619 = vmatpush1.msra.mxu0 0.0
        %620 = vmatprep.mubr.f32.mxu0 0.0
        %621 = vmatmul.mubr.f32.gmra.mrb[0].mxu0 %v483
        %v622 = vpop.f32.mrb[0].mxu0
        %v623 = vadd.f32 0.0, %v622
        %v624 = vpop.f32.mrb[0].mxu0
        %v625 = vadd.f32 0.0, %v624
        %626 = vdwg.mxu0
        %627 = vrot.lane.b32.xlu0 %v454, 48
        %v628 = vpop.permute.xlu0 %627
        %v629 = vsel %vm482, %v628, 0
        %631 = vmatprep.subr.mxu0 %v456
        %632 = vmatpush1.msra.mxu0 %v455
        %633 = vmatprep.subr.mxu0 %v460
        %634 = vmatpush1.msra.mxu0 %v459
        %635 = vmatprep.subr.mxu0 0.0
        %636 = vmatpush1.msra.mxu0 0.0
        %637 = vmatprep.subr.mxu0 0.0
        %638 = vmatpush1.msra.mxu0 0.0
        %639 = vmatprep.subr.mxu0 0.0
        %640 = vmatpush1.msra.mxu0 0.0
        %641 = vmatprep.subr.mxu0 0.0
        %642 = vmatpush1.msra.mxu0 0.0
        %643 = vmatprep.subr.mxu0 0.0
        %644 = vmatpush1.msra.mxu0 0.0
        %645 = vmatprep.subr.mxu0 0.0
        %646 = vmatpush1.msra.mxu0 0.0
        %647 = vmatprep.subr.mxu0 0.0
        %648 = vmatpush1.msra.mxu0 0.0
        %649 = vmatprep.subr.mxu0 0.0
        %650 = vmatpush1.msra.mxu0 0.0
        %651 = vmatprep.subr.mxu0 0.0
        %652 = vmatpush1.msra.mxu0 0.0
        %653 = vmatprep.subr.mxu0 0.0
        %654 = vmatpush1.msra.mxu0 0.0
        %655 = vmatprep.subr.mxu0 0.0
        %656 = vmatpush1.msra.mxu0 0.0
        %657 = vmatprep.subr.mxu0 0.0
        %658 = vmatpush1.msra.mxu0 0.0
        %659 = vmatprep.subr.mxu0 0.0
        %660 = vmatpush1.msra.mxu0 0.0
        %661 = vmatprep.subr.mxu0 0.0
        %662 = vmatpush1.msra.mxu0 0.0
        %663 = vmatprep.subr.mxu0 0.0
        %664 = vmatpush1.msra.mxu0 0.0
        %665 = vmatprep.subr.mxu0 0.0
        %666 = vmatpush1.msra.mxu0 0.0
        %667 = vmatprep.subr.mxu0 0.0
        %668 = vmatpush1.msra.mxu0 0.0
        %669 = vmatprep.subr.mxu0 0.0
        %670 = vmatpush1.msra.mxu0 0.0
        %671 = vmatprep.subr.mxu0 0.0
        %672 = vmatpush1.msra.mxu0 0.0
        %673 = vmatprep.subr.mxu0 0.0
        %674 = vmatpush1.msra.mxu0 0.0
        %675 = vmatprep.subr.mxu0 0.0
        %676 = vmatpush1.msra.mxu0 0.0
        %677 = vmatprep.subr.mxu0 0.0
        %678 = vmatpush1.msra.mxu0 0.0
        %679 = vmatprep.subr.mxu0 0.0
        %680 = vmatpush1.msra.mxu0 0.0
        %681 = vmatprep.subr.mxu0 0.0
        %682 = vmatpush1.msra.mxu0 0.0
        %683 = vmatprep.subr.mxu0 0.0
        %684 = vmatpush1.msra.mxu0 0.0
        %685 = vmatprep.subr.mxu0 0.0
        %686 = vmatpush1.msra.mxu0 0.0
        %687 = vmatprep.subr.mxu0 0.0
        %688 = vmatpush1.msra.mxu0 0.0
        %689 = vmatprep.subr.mxu0 0.0
        %690 = vmatpush1.msra.mxu0 0.0
        %691 = vmatprep.subr.mxu0 0.0
        %692 = vmatpush1.msra.mxu0 0.0
        %693 = vmatprep.subr.mxu0 0.0
        %694 = vmatpush1.msra.mxu0 0.0
        %695 = vmatprep.mubr.f32.mxu0 0.0
        %696 = vmatmul.mubr.f32.gmra.mrb[0].mxu0 %v629
        %v697 = vpop.f32.mrb[0].mxu0
        %v698 = vadd.f32 0.0, %v697
        %v699 = vpop.f32.mrb[0].mxu0
        %v700 = vadd.f32 0.0, %v699
        %701 = vdwg.mxu0
        %702 = vmatprep.subr.mxu0 %v458
        %703 = vmatpush1.msra.mxu0 %v457
        %704 = vmatprep.subr.mxu0 %v462
        %705 = vmatpush1.msra.mxu0 %v461
        %706 = vmatprep.subr.mxu0 0.0
        %707 = vmatpush1.msra.mxu0 0.0
        %708 = vmatprep.subr.mxu0 0.0
        %709 = vmatpush1.msra.mxu0 0.0
        %710 = vmatprep.subr.mxu0 0.0
        %711 = vmatpush1.msra.mxu0 0.0
        %712 = vmatprep.subr.mxu0 0.0
        %713 = vmatpush1.msra.mxu0 0.0
        %714 = vmatprep.subr.mxu0 0.0
        %715 = vmatpush1.msra.mxu0 0.0
        %716 = vmatprep.subr.mxu0 0.0
        %717 = vmatpush1.msra.mxu0 0.0
        %718 = vmatprep.subr.mxu0 0.0
        %719 = vmatpush1.msra.mxu0 0.0
        %720 = vmatprep.subr.mxu0 0.0
        %721 = vmatpush1.msra.mxu0 0.0
        %722 = vmatprep.subr.mxu0 0.0
        %723 = vmatpush1.msra.mxu0 0.0
        %724 = vmatprep.subr.mxu0 0.0
        %725 = vmatpush1.msra.mxu0 0.0
        %726 = vmatprep.subr.mxu0 0.0
        %727 = vmatpush1.msra.mxu0 0.0
        %728 = vmatprep.subr.mxu0 0.0
        %729 = vmatpush1.msra.mxu0 0.0
        %730 = vmatprep.subr.mxu0 0.0
        %731 = vmatpush1.msra.mxu0 0.0
        %732 = vmatprep.subr.mxu0 0.0
        %733 = vmatpush1.msra.mxu0 0.0
        %734 = vmatprep.subr.mxu0 0.0
        %735 = vmatpush1.msra.mxu0 0.0
        %736 = vmatprep.subr.mxu0 0.0
        %737 = vmatpush1.msra.mxu0 0.0
        %738 = vmatprep.subr.mxu0 0.0
        %739 = vmatpush1.msra.mxu0 0.0
        %740 = vmatprep.subr.mxu0 0.0
        %741 = vmatpush1.msra.mxu0 0.0
        %742 = vmatprep.subr.mxu0 0.0
        %743 = vmatpush1.msra.mxu0 0.0
        %744 = vmatprep.subr.mxu0 0.0
        %745 = vmatpush1.msra.mxu0 0.0
        %746 = vmatprep.subr.mxu0 0.0
        %747 = vmatpush1.msra.mxu0 0.0
        %748 = vmatprep.subr.mxu0 0.0
        %749 = vmatpush1.msra.mxu0 0.0
        %750 = vmatprep.subr.mxu0 0.0
        %751 = vmatpush1.msra.mxu0 0.0
        %752 = vmatprep.subr.mxu0 0.0
        %753 = vmatpush1.msra.mxu0 0.0
        %754 = vmatprep.subr.mxu0 0.0
        %755 = vmatpush1.msra.mxu0 0.0
        %756 = vmatprep.subr.mxu0 0.0
        %757 = vmatpush1.msra.mxu0 0.0
        %758 = vmatprep.subr.mxu0 0.0
        %759 = vmatpush1.msra.mxu0 0.0
        %760 = vmatprep.subr.mxu0 0.0
        %761 = vmatpush1.msra.mxu0 0.0
        %762 = vmatprep.subr.mxu0 0.0
        %763 = vmatpush1.msra.mxu0 0.0
        %764 = vmatprep.subr.mxu0 0.0
        %765 = vmatpush1.msra.mxu0 0.0
        %766 = vmatprep.mubr.f32.mxu0 0.0
        %767 = vmatmul.mubr.f32.gmra.mrb[0].mxu0 %v629
        %v768 = vpop.f32.mrb[0].mxu0
        %v769 = vadd.f32 0.0, %v768
        %v770 = vpop.f32.mrb[0].mxu0
        %v771 = vadd.f32 0.0, %v770
        %772 = vdwg.mxu0
        %773 = vrot.lane.b32.xlu0 %v454, 32
        %v774 = vpop.permute.xlu0 %773
        %v775 = vsel %vm482, %v774, 0
        %777 = vmatprep.subr.mxu0 %v456
        %778 = vmatpush1.msra.mxu0 %v455
        %779 = vmatprep.subr.mxu0 %v460
        %780 = vmatpush1.msra.mxu0 %v459
        %781 = vmatprep.subr.mxu0 0.0
        %782 = vmatpush1.msra.mxu0 0.0
        %783 = vmatprep.subr.mxu0 0.0
        %784 = vmatpush1.msra.mxu0 0.0
        %785 = vmatprep.subr.mxu0 0.0
        %786 = vmatpush1.msra.mxu0 0.0
        %787 = vmatprep.subr.mxu0 0.0
        %788 = vmatpush1.msra.mxu0 0.0
        %789 = vmatprep.subr.mxu0 0.0
        %790 = vmatpush1.msra.mxu0 0.0
        %791 = vmatprep.subr.mxu0 0.0
        %792 = vmatpush1.msra.mxu0 0.0
        %793 = vmatprep.subr.mxu0 0.0
        %794 = vmatpush1.msra.mxu0 0.0
        %795 = vmatprep.subr.mxu0 0.0
        %796 = vmatpush1.msra.mxu0 0.0
        %797 = vmatprep.subr.mxu0 0.0
        %798 = vmatpush1.msra.mxu0 0.0
        %799 = vmatprep.subr.mxu0 0.0
        %800 = vmatpush1.msra.mxu0 0.0
        %801 = vmatprep.subr.mxu0 0.0
        %802 = vmatpush1.msra.mxu0 0.0
        %803 = vmatprep.subr.mxu0 0.0
        %804 = vmatpush1.msra.mxu0 0.0
        %805 = vmatprep.subr.mxu0 0.0
        %806 = vmatpush1.msra.mxu0 0.0
        %807 = vmatprep.subr.mxu0 0.0
        %808 = vmatpush1.msra.mxu0 0.0
        %809 = vmatprep.subr.mxu0 0.0
        %810 = vmatpush1.msra.mxu0 0.0
        %811 = vmatprep.subr.mxu0 0.0
        %812 = vmatpush1.msra.mxu0 0.0
        %813 = vmatprep.subr.mxu0 0.0
        %814 = vmatpush1.msra.mxu0 0.0
        %815 = vmatprep.subr.mxu0 0.0
        %816 = vmatpush1.msra.mxu0 0.0
        %817 = vmatprep.subr.mxu0 0.0
        %818 = vmatpush1.msra.mxu0 0.0
        %819 = vmatprep.subr.mxu0 0.0
        %820 = vmatpush1.msra.mxu0 0.0
        %821 = vmatprep.subr.mxu0 0.0
        %822 = vmatpush1.msra.mxu0 0.0
        %823 = vmatprep.subr.mxu0 0.0
        %824 = vmatpush1.msra.mxu0 0.0
        %825 = vmatprep.subr.mxu0 0.0
        %826 = vmatpush1.msra.mxu0 0.0
        %827 = vmatprep.subr.mxu0 0.0
        %828 = vmatpush1.msra.mxu0 0.0
        %829 = vmatprep.subr.mxu0 0.0
        %830 = vmatpush1.msra.mxu0 0.0
        %831 = vmatprep.subr.mxu0 0.0
        %832 = vmatpush1.msra.mxu0 0.0
        %833 = vmatprep.subr.mxu0 0.0
        %834 = vmatpush1.msra.mxu0 0.0
        %835 = vmatprep.subr.mxu0 0.0
        %836 = vmatpush1.msra.mxu0 0.0
        %837 = vmatprep.subr.mxu0 0.0
        %838 = vmatpush1.msra.mxu0 0.0
        %839 = vmatprep.subr.mxu0 0.0
        %840 = vmatpush1.msra.mxu0 0.0
        %841 = vmatprep.mubr.f32.mxu0 0.0
        %842 = vmatmul.mubr.f32.gmra.mrb[0].mxu0 %v775
        %v843 = vpop.f32.mrb[0].mxu0
        %v844 = vadd.f32 0.0, %v843
        %v845 = vpop.f32.mrb[0].mxu0
        %v846 = vadd.f32 0.0, %v845
        %847 = vdwg.mxu0
        %848 = vmatprep.subr.mxu0 %v458
        %849 = vmatpush1.msra.mxu0 %v457
        %850 = vmatprep.subr.mxu0 %v462
        %851 = vmatpush1.msra.mxu0 %v461
        %852 = vmatprep.subr.mxu0 0.0
        %853 = vmatpush1.msra.mxu0 0.0
        %854 = vmatprep.subr.mxu0 0.0
        %855 = vmatpush1.msra.mxu0 0.0
        %856 = vmatprep.subr.mxu0 0.0
        %857 = vmatpush1.msra.mxu0 0.0
        %858 = vmatprep.subr.mxu0 0.0
        %859 = vmatpush1.msra.mxu0 0.0
        %860 = vmatprep.subr.mxu0 0.0
        %861 = vmatpush1.msra.mxu0 0.0
        %862 = vmatprep.subr.mxu0 0.0
        %863 = vmatpush1.msra.mxu0 0.0
        %864 = vmatprep.subr.mxu0 0.0
        %865 = vmatpush1.msra.mxu0 0.0
        %866 = vmatprep.subr.mxu0 0.0
        %867 = vmatpush1.msra.mxu0 0.0
        %868 = vmatprep.subr.mxu0 0.0
        %869 = vmatpush1.msra.mxu0 0.0
        %870 = vmatprep.subr.mxu0 0.0
        %871 = vmatpush1.msra.mxu0 0.0
        %872 = vmatprep.subr.mxu0 0.0
        %873 = vmatpush1.msra.mxu0 0.0
        %874 = vmatprep.subr.mxu0 0.0
        %875 = vmatpush1.msra.mxu0 0.0
        %876 = vmatprep.subr.mxu0 0.0
        %877 = vmatpush1.msra.mxu0 0.0
        %878 = vmatprep.subr.mxu0 0.0
        %879 = vmatpush1.msra.mxu0 0.0
        %880 = vmatprep.subr.mxu0 0.0
        %881 = vmatpush1.msra.mxu0 0.0
        %882 = vmatprep.subr.mxu0 0.0
        %883 = vmatpush1.msra.mxu0 0.0
        %884 = vmatprep.subr.mxu0 0.0
        %885 = vmatpush1.msra.mxu0 0.0
        %886 = vmatprep.subr.mxu0 0.0
        %887 = vmatpush1.msra.mxu0 0.0
        %888 = vmatprep.subr.mxu0 0.0
        %889 = vmatpush1.msra.mxu0 0.0
        %890 = vmatprep.subr.mxu0 0.0
        %891 = vmatpush1.msra.mxu0 0.0
        %892 = vmatprep.subr.mxu0 0.0
        %893 = vmatpush1.msra.mxu0 0.0
        %894 = vmatprep.subr.mxu0 0.0
        %895 = vmatpush1.msra.mxu0 0.0
        %896 = vmatprep.subr.mxu0 0.0
        %897 = vmatpush1.msra.mxu0 0.0
        %898 = vmatprep.subr.mxu0 0.0
        %899 = vmatpush1.msra.mxu0 0.0
        %900 = vmatprep.subr.mxu0 0.0
        %901 = vmatpush1.msra.mxu0 0.0
        %902 = vmatprep.subr.mxu0 0.0
        %903 = vmatpush1.msra.mxu0 0.0
        %904 = vmatprep.subr.mxu0 0.0
        %905 = vmatpush1.msra.mxu0 0.0
        %906 = vmatprep.subr.mxu0 0.0
        %907 = vmatpush1.msra.mxu0 0.0
        %908 = vmatprep.subr.mxu0 0.0
        %909 = vmatpush1.msra.mxu0 0.0
        %910 = vmatprep.subr.mxu0 0.0
        %911 = vmatpush1.msra.mxu0 0.0
        %912 = vmatprep.mubr.f32.mxu0 0.0
        %913 = vmatmul.mubr.f32.gmra.mrb[0].mxu0 %v775
        %v914 = vpop.f32.mrb[0].mxu0
        %v915 = vadd.f32 0.0, %v914
        %v916 = vpop.f32.mrb[0].mxu0
        %v917 = vadd.f32 0.0, %v916
        %918 = vdwg.mxu0
        %v919 = vsel %vm380, %v454, 0
        %921 = vmatprep.subr.mxu0 %v464
        %922 = vmatpush1.msra.mxu0 %v463
        %923 = vmatprep.subr.mxu0 %v468
        %924 = vmatpush1.msra.mxu0 %v467
        %925 = vmatprep.subr.mxu0 %v472
        %926 = vmatpush1.msra.mxu0 %v471
        %927 = vmatprep.subr.mxu0 %v476
        %928 = vmatpush1.msra.mxu0 %v475
        %929 = vmatprep.subr.mxu0 0.0
        %930 = vmatpush1.msra.mxu0 0.0
        %931 = vmatprep.subr.mxu0 0.0
        %932 = vmatpush1.msra.mxu0 0.0
        %933 = vmatprep.subr.mxu0 0.0
        %934 = vmatpush1.msra.mxu0 0.0
        %935 = vmatprep.subr.mxu0 0.0
        %936 = vmatpush1.msra.mxu0 0.0
        %937 = vmatprep.subr.mxu0 0.0
        %938 = vmatpush1.msra.mxu0 0.0
        %939 = vmatprep.subr.mxu0 0.0
        %940 = vmatpush1.msra.mxu0 0.0
        %941 = vmatprep.subr.mxu0 0.0
        %942 = vmatpush1.msra.mxu0 0.0
        %943 = vmatprep.subr.mxu0 0.0
        %944 = vmatpush1.msra.mxu0 0.0
        %945 = vmatprep.subr.mxu0 0.0
        %946 = vmatpush1.msra.mxu0 0.0
        %947 = vmatprep.subr.mxu0 0.0
        %948 = vmatpush1.msra.mxu0 0.0
        %949 = vmatprep.subr.mxu0 0.0
        %950 = vmatpush1.msra.mxu0 0.0
        %951 = vmatprep.subr.mxu0 0.0
        %952 = vmatpush1.msra.mxu0 0.0
        %953 = vmatprep.subr.mxu0 0.0
        %954 = vmatpush1.msra.mxu0 0.0
        %955 = vmatprep.subr.mxu0 0.0
        %956 = vmatpush1.msra.mxu0 0.0
        %957 = vmatprep.subr.mxu0 0.0
        %958 = vmatpush1.msra.mxu0 0.0
        %959 = vmatprep.subr.mxu0 0.0
        %960 = vmatpush1.msra.mxu0 0.0
        %961 = vmatprep.subr.mxu0 0.0
        %962 = vmatpush1.msra.mxu0 0.0
        %963 = vmatprep.subr.mxu0 0.0
        %964 = vmatpush1.msra.mxu0 0.0
        %965 = vmatprep.subr.mxu0 0.0
        %966 = vmatpush1.msra.mxu0 0.0
        %967 = vmatprep.subr.mxu0 0.0
        %968 = vmatpush1.msra.mxu0 0.0
        %969 = vmatprep.subr.mxu0 0.0
        %970 = vmatpush1.msra.mxu0 0.0
        %971 = vmatprep.subr.mxu0 0.0
        %972 = vmatpush1.msra.mxu0 0.0
        %973 = vmatprep.subr.mxu0 0.0
        %974 = vmatpush1.msra.mxu0 0.0
        %975 = vmatprep.subr.mxu0 0.0
        %976 = vmatpush1.msra.mxu0 0.0
        %977 = vmatprep.subr.mxu0 0.0
        %978 = vmatpush1.msra.mxu0 0.0
        %979 = vmatprep.subr.mxu0 0.0
        %980 = vmatpush1.msra.mxu0 0.0
        %981 = vmatprep.subr.mxu0 0.0
        %982 = vmatpush1.msra.mxu0 0.0
        %983 = vmatprep.subr.mxu0 0.0
        %984 = vmatpush1.msra.mxu0 0.0
        %985 = vmatprep.mubr.f32.mxu0 0.0
        %986 = vmatmul.mubr.f32.gmra.mrb[0].mxu0 %v919
        %v987 = vpop.f32.mrb[0].mxu0
        %v988 = vadd.f32 0.0, %v987
        %v989 = vpop.f32.mrb[0].mxu0
        %v990 = vadd.f32 0.0, %v989
        %991 = vdwg.mxu0
        %992 = vmatprep.subr.mxu0 %v466
        %993 = vmatpush1.msra.mxu0 %v465
        %994 = vmatprep.subr.mxu0 %v470
        %995 = vmatpush1.msra.mxu0 %v469
        %996 = vmatprep.subr.mxu0 %v474
        %997 = vmatpush1.msra.mxu0 %v473
        %998 = vmatprep.subr.mxu0 %v478
        %999 = vmatpush1.msra.mxu0 %v477
        %1000 = vmatprep.subr.mxu0 0.0
        %1001 = vmatpush1.msra.mxu0 0.0
        %1002 = vmatprep.subr.mxu0 0.0
        %1003 = vmatpush1.msra.mxu0 0.0
        %1004 = vmatprep.subr.mxu0 0.0
        %1005 = vmatpush1.msra.mxu0 0.0
        %1006 = vmatprep.subr.mxu0 0.0
        %1007 = vmatpush1.msra.mxu0 0.0
        %1008 = vmatprep.subr.mxu0 0.0
        %1009 = vmatpush1.msra.mxu0 0.0
        %1010 = vmatprep.subr.mxu0 0.0
        %1011 = vmatpush1.msra.mxu0 0.0
        %1012 = vmatprep.subr.mxu0 0.0
        %1013 = vmatpush1.msra.mxu0 0.0
        %1014 = vmatprep.subr.mxu0 0.0
        %1015 = vmatpush1.msra.mxu0 0.0
        %1016 = vmatprep.subr.mxu0 0.0
        %1017 = vmatpush1.msra.mxu0 0.0
        %1018 = vmatprep.subr.mxu0 0.0
        %1019 = vmatpush1.msra.mxu0 0.0
        %1020 = vmatprep.subr.mxu0 0.0
        %1021 = vmatpush1.msra.mxu0 0.0
        %1022 = vmatprep.subr.mxu0 0.0
        %1023 = vmatpush1.msra.mxu0 0.0
        %1024 = vmatprep.subr.mxu0 0.0
        %1025 = vmatpush1.msra.mxu0 0.0
        %1026 = vmatprep.subr.mxu0 0.0
        %1027 = vmatpush1.msra.mxu0 0.0
        %1028 = vmatprep.subr.mxu0 0.0
        %1029 = vmatpush1.msra.mxu0 0.0
        %1030 = vmatprep.subr.mxu0 0.0
        %1031 = vmatpush1.msra.mxu0 0.0
        %1032 = vmatprep.subr.mxu0 0.0
        %1033 = vmatpush1.msra.mxu0 0.0
        %1034 = vmatprep.subr.mxu0 0.0
        %1035 = vmatpush1.msra.mxu0 0.0
        %1036 = vmatprep.subr.mxu0 0.0
        %1037 = vmatpush1.msra.mxu0 0.0
        %1038 = vmatprep.subr.mxu0 0.0
        %1039 = vmatpush1.msra.mxu0 0.0
        %1040 = vmatprep.subr.mxu0 0.0
        %1041 = vmatpush1.msra.mxu0 0.0
        %1042 = vmatprep.subr.mxu0 0.0
        %1043 = vmatpush1.msra.mxu0 0.0
        %1044 = vmatprep.subr.mxu0 0.0
        %1045 = vmatpush1.msra.mxu0 0.0
        %1046 = vmatprep.subr.mxu0 0.0
        %1047 = vmatpush1.msra.mxu0 0.0
        %1048 = vmatprep.subr.mxu0 0.0
        %1049 = vmatpush1.msra.mxu0 0.0
        %1050 = vmatprep.subr.mxu0 0.0
        %1051 = vmatpush1.msra.mxu0 0.0
        %1052 = vmatprep.subr.mxu0 0.0
        %1053 = vmatpush1.msra.mxu0 0.0
        %1054 = vmatprep.subr.mxu0 0.0
        %1055 = vmatpush1.msra.mxu0 0.0
        %1056 = vmatprep.mubr.f32.mxu0 0.0
        %1057 = vmatmul.mubr.f32.gmra.mrb[0].mxu0 %v919
        %v1058 = vpop.f32.mrb[0].mxu0
        %v1059 = vadd.f32 0.0, %v1058
        %v1060 = vpop.f32.mrb[0].mxu0
        %v1061 = vadd.f32 0.0, %v1060
        %1062 = vdwg.mxu0
        %1063 = vrot.lane.b32.xlu0 %v454, 96
        %v1064 = vpop.permute.xlu0 %1063
        %v1065 = vsel %vm380, %v1064, 0
        %1067 = vmatprep.subr.mxu0 %v464
        %1068 = vmatpush1.msra.mxu0 %v463
        %1069 = vmatprep.subr.mxu0 %v468
        %1070 = vmatpush1.msra.mxu0 %v467
        %1071 = vmatprep.subr.mxu0 %v472
        %1072 = vmatpush1.msra.mxu0 %v471
        %1073 = vmatprep.subr.mxu0 %v476
        %1074 = vmatpush1.msra.mxu0 %v475
        %1075 = vmatprep.subr.mxu0 0.0
        %1076 = vmatpush1.msra.mxu0 0.0
        %1077 = vmatprep.subr.mxu0 0.0
        %1078 = vmatpush1.msra.mxu0 0.0
        %1079 = vmatprep.subr.mxu0 0.0
        %1080 = vmatpush1.msra.mxu0 0.0
        %1081 = vmatprep.subr.mxu0 0.0
        %1082 = vmatpush1.msra.mxu0 0.0
        %1083 = vmatprep.subr.mxu0 0.0
        %1084 = vmatpush1.msra.mxu0 0.0
        %1085 = vmatprep.subr.mxu0 0.0
        %1086 = vmatpush1.msra.mxu0 0.0
        %1087 = vmatprep.subr.mxu0 0.0
        %1088 = vmatpush1.msra.mxu0 0.0
        %1089 = vmatprep.subr.mxu0 0.0
        %1090 = vmatpush1.msra.mxu0 0.0
        %1091 = vmatprep.subr.mxu0 0.0
        %1092 = vmatpush1.msra.mxu0 0.0
        %1093 = vmatprep.subr.mxu0 0.0
        %1094 = vmatpush1.msra.mxu0 0.0
        %1095 = vmatprep.subr.mxu0 0.0
        %1096 = vmatpush1.msra.mxu0 0.0
        %1097 = vmatprep.subr.mxu0 0.0
        %1098 = vmatpush1.msra.mxu0 0.0
        %1099 = vmatprep.subr.mxu0 0.0
        %1100 = vmatpush1.msra.mxu0 0.0
        %1101 = vmatprep.subr.mxu0 0.0
        %1102 = vmatpush1.msra.mxu0 0.0
        %1103 = vmatprep.subr.mxu0 0.0
        %1104 = vmatpush1.msra.mxu0 0.0
        %1105 = vmatprep.subr.mxu0 0.0
        %1106 = vmatpush1.msra.mxu0 0.0
        %1107 = vmatprep.subr.mxu0 0.0
        %1108 = vmatpush1.msra.mxu0 0.0
        %1109 = vmatprep.subr.mxu0 0.0
        %1110 = vmatpush1.msra.mxu0 0.0
        %1111 = vmatprep.subr.mxu0 0.0
        %1112 = vmatpush1.msra.mxu0 0.0
        %1113 = vmatprep.subr.mxu0 0.0
        %1114 = vmatpush1.msra.mxu0 0.0
        %1115 = vmatprep.subr.mxu0 0.0
        %1116 = vmatpush1.msra.mxu0 0.0
        %1117 = vmatprep.subr.mxu0 0.0
        %1118 = vmatpush1.msra.mxu0 0.0
        %1119 = vmatprep.subr.mxu0 0.0
        %1120 = vmatpush1.msra.mxu0 0.0
        %1121 = vmatprep.subr.mxu0 0.0
        %1122 = vmatpush1.msra.mxu0 0.0
        %1123 = vmatprep.subr.mxu0 0.0
        %1124 = vmatpush1.msra.mxu0 0.0
        %1125 = vmatprep.subr.mxu0 0.0
        %1126 = vmatpush1.msra.mxu0 0.0
        %1127 = vmatprep.subr.mxu0 0.0
        %1128 = vmatpush1.msra.mxu0 0.0
        %1129 = vmatprep.subr.mxu0 0.0
        %1130 = vmatpush1.msra.mxu0 0.0
        %1131 = vmatprep.mubr.f32.mxu0 0.0
        %1132 = vmatmul.mubr.f32.gmra.mrb[0].mxu0 %v1065
        %v1133 = vpop.f32.mrb[0].mxu0
        %v1134 = vadd.f32 0.0, %v1133
        %v1135 = vpop.f32.mrb[0].mxu0
        %v1136 = vadd.f32 0.0, %v1135
        %1137 = vdwg.mxu0
        %1138 = vmatprep.subr.mxu0 %v466
        %1139 = vmatpush1.msra.mxu0 %v465
        %1140 = vmatprep.subr.mxu0 %v470
        %1141 = vmatpush1.msra.mxu0 %v469
        %1142 = vmatprep.subr.mxu0 %v474
        %1143 = vmatpush1.msra.mxu0 %v473
        %1144 = vmatprep.subr.mxu0 %v478
        %1145 = vmatpush1.msra.mxu0 %v477
        %1146 = vmatprep.subr.mxu0 0.0
        %1147 = vmatpush1.msra.mxu0 0.0
        %1148 = vmatprep.subr.mxu0 0.0
        %1149 = vmatpush1.msra.mxu0 0.0
        %1150 = vmatprep.subr.mxu0 0.0
        %1151 = vmatpush1.msra.mxu0 0.0
        %1152 = vmatprep.subr.mxu0 0.0
        %1153 = vmatpush1.msra.mxu0 0.0
        %1154 = vmatprep.subr.mxu0 0.0
        %1155 = vmatpush1.msra.mxu0 0.0
        %1156 = vmatprep.subr.mxu0 0.0
        %1157 = vmatpush1.msra.mxu0 0.0
        %1158 = vmatprep.subr.mxu0 0.0
        %1159 = vmatpush1.msra.mxu0 0.0
        %1160 = vmatprep.subr.mxu0 0.0
        %1161 = vmatpush1.msra.mxu0 0.0
        %1162 = vmatprep.subr.mxu0 0.0
        %1163 = vmatpush1.msra.mxu0 0.0
        %1164 = vmatprep.subr.mxu0 0.0
        %1165 = vmatpush1.msra.mxu0 0.0
        %1166 = vmatprep.subr.mxu0 0.0
        %1167 = vmatpush1.msra.mxu0 0.0
        %1168 = vmatprep.subr.mxu0 0.0
        %1169 = vmatpush1.msra.mxu0 0.0
        %1170 = vmatprep.subr.mxu0 0.0
        %1171 = vmatpush1.msra.mxu0 0.0
        %1172 = vmatprep.subr.mxu0 0.0
        %1173 = vmatpush1.msra.mxu0 0.0
        %1174 = vmatprep.subr.mxu0 0.0
        %1175 = vmatpush1.msra.mxu0 0.0
        %1176 = vmatprep.subr.mxu0 0.0
        %1177 = vmatpush1.msra.mxu0 0.0
        %1178 = vmatprep.subr.mxu0 0.0
        %1179 = vmatpush1.msra.mxu0 0.0
        %1180 = vmatprep.subr.mxu0 0.0
        %1181 = vmatpush1.msra.mxu0 0.0
        %1182 = vmatprep.subr.mxu0 0.0
        %1183 = vmatpush1.msra.mxu0 0.0
        %1184 = vmatprep.subr.mxu0 0.0
        %1185 = vmatpush1.msra.mxu0 0.0
        %1186 = vmatprep.subr.mxu0 0.0
        %1187 = vmatpush1.msra.mxu0 0.0
        %1188 = vmatprep.subr.mxu0 0.0
        %1189 = vmatpush1.msra.mxu0 0.0
        %1190 = vmatprep.subr.mxu0 0.0
        %1191 = vmatpush1.msra.mxu0 0.0
        %1192 = vmatprep.subr.mxu0 0.0
        %1193 = vmatpush1.msra.mxu0 0.0
        %1194 = vmatprep.subr.mxu0 0.0
        %1195 = vmatpush1.msra.mxu0 0.0
        %1196 = vmatprep.subr.mxu0 0.0
        %1197 = vmatpush1.msra.mxu0 0.0
        %1198 = vmatprep.subr.mxu0 0.0
        %1199 = vmatpush1.msra.mxu0 0.0
        %1200 = vmatprep.subr.mxu0 0.0
        %1201 = vmatpush1.msra.mxu0 0.0
        %1202 = vmatprep.mubr.f32.mxu0 0.0
        %1203 = vmatmul.mubr.f32.gmra.mrb[0].mxu0 %v1065
        %v1204 = vpop.f32.mrb[0].mxu0
        %v1205 = vadd.f32 0.0, %v1204
        %v1206 = vpop.f32.mrb[0].mxu0
        %v1207 = vadd.f32 0.0, %v1206
        %1208 = vdwg.mxu0
        %1209 = vst.msk [vmem:[#allocation2] sm:$0xff] %vm380, %v454
        %1211 = vst.msk [vmem:[#allocation3] sm:$0xff] %vm380, %v1064
        %1212 = vst [vmem:[#allocation4] sm:$0xff] %v552
        %1213 = vst [vmem:[#allocation4 + $0x8] sm:$0xff] %v554
        %1214 = vst [vmem:[#allocation4 + $0x10] sm:$0xff] %v623
        %1215 = vst [vmem:[#allocation4 + $0x18] sm:$0xff] %v625
        %1216 = vst [vmem:[#allocation5] sm:$0xff] %v698
        %1217 = vst [vmem:[#allocation5 + $0x8] sm:$0xff] %v700
        %1218 = vst [vmem:[#allocation5 + $0x10] sm:$0xff] %v769
        %1219 = vst [vmem:[#allocation5 + $0x18] sm:$0xff] %v771
        %1220 = vst [vmem:[#allocation6] sm:$0xff] %v844
        %1221 = vst [vmem:[#allocation6 + $0x8] sm:$0xff] %v846
        %1222 = vst [vmem:[#allocation6 + $0x10] sm:$0xff] %v915
        %1223 = vst [vmem:[#allocation6 + $0x18] sm:$0xff] %v917
        %v1224 = vmul.f32 %v552, %v1134
        %v1225 = vmul.f32 %v554, %v1136
        %v1226 = vmul.f32 %v623, %v1205
        %v1227 = vmul.f32 %v625, %v1207
        %1228 = vst [vmem:[#allocation7] sm:$0xff] %v1224
        %1229 = vst [vmem:[#allocation7 + $0x8] sm:$0xff] %v1225
        %1230 = vst [vmem:[#allocation7 + $0x10] sm:$0xff] %v1226
        %1231 = vst [vmem:[#allocation7 + $0x18] sm:$0xff] %v1227
        %v1232 = vmul.f32 %v844, %v988
        %v1233 = vmul.f32 %v846, %v990
        %v1234 = vmul.f32 %v915, %v1059
        %v1235 = vmul.f32 %v917, %v1061
        %1236 = vst [vmem:[#allocation8] sm:$0xff] %v1232
        %1237 = vst [vmem:[#allocation8 + $0x8] sm:$0xff] %v1233
        %1238 = vst [vmem:[#allocation8 + $0x10] sm:$0xff] %v1234
        %1239 = vst [vmem:[#allocation8 + $0x18] sm:$0xff] %v1235
        %v1240 = vld [vmem:[%s4] sm:$0xff]
        %v1241 = vld [vmem:[%s4 + $0x8] sm:$0xff]
        %v1242 = vld [vmem:[%s4 + $0x10] sm:$0xff]
        %v1243 = vld [vmem:[%s4 + $0x18] sm:$0xff]
        %v1244 = vld [vmem:[%s4 + $0x20] sm:$0xff]
        %v1245 = vld [vmem:[%s4 + $0x28] sm:$0xff]
        %v1246 = vld [vmem:[%s4 + $0x30] sm:$0xff]
        %v1247 = vld [vmem:[%s4 + $0x38] sm:$0xff]
        %v1248 = vld [vmem:[%s4 + $0x40] sm:$0xff]
        %v1249 = vld [vmem:[%s4 + $0x48] sm:$0xff]
        %v1250 = vld [vmem:[%s4 + $0x50] sm:$0xff]
        %v1251 = vld [vmem:[%s4 + $0x58] sm:$0xff]
        %v1252 = vld [vmem:[%s4 + $0x60] sm:$0xff]
        %v1253 = vld [vmem:[%s4 + $0x68] sm:$0xff]
        %v1254 = vld [vmem:[%s4 + $0x70] sm:$0xff]
        %v1255 = vld [vmem:[%s4 + $0x78] sm:$0xff]
        %v1256 = vld [vmem:[%s350] sm:$0xff]
        %v1257 = vld [vmem:[%s350 + $0x8] sm:$0xff]
        %v1258 = vld [vmem:[%s350 + $0x10] sm:$0xff]
        %v1259 = vld [vmem:[%s350 + $0x18] sm:$0xff]
        %v1260 = vld [vmem:[%s350 + $0x20] sm:$0xff]
        %v1261 = vld [vmem:[%s350 + $0x28] sm:$0xff]
        %v1262 = vld [vmem:[%s350 + $0x30] sm:$0xff]
        %v1263 = vld [vmem:[%s350 + $0x38] sm:$0xff]
        %v1264 = vld [vmem:[%s350 + $0x40] sm:$0xff]
        %v1265 = vld [vmem:[%s350 + $0x48] sm:$0xff]
        %v1266 = vld [vmem:[%s350 + $0x50] sm:$0xff]
        %v1267 = vld [vmem:[%s350 + $0x58] sm:$0xff]
        %v1268 = vld [vmem:[%s350 + $0x60] sm:$0xff]
        %v1269 = vld [vmem:[%s350 + $0x68] sm:$0xff]
        %v1270 = vld [vmem:[%s350 + $0x70] sm:$0xff]
        %v1271 = vld [vmem:[%s350 + $0x78] sm:$0xff]
        %v1272 = vld [vmem:[%s350 + $0x80] sm:$0xff]
        %v1273 = vld [vmem:[%s350 + $0x88] sm:$0xff]
        %v1274 = vld [vmem:[%s350 + $0x90] sm:$0xff]
        %v1275 = vld [vmem:[%s350 + $0x98] sm:$0xff]
        %v1276 = vld [vmem:[%s5] sm:$0xff]
        %v1277 = vld [vmem:[%s5 + $0x8] sm:$0xff]
        %v1278 = vld [vmem:[%s5 + $0x10] sm:$0xff]
        %v1279 = vld [vmem:[%s5 + $0x18] sm:$0xff]
        %v1280 = vld [vmem:[%s5 + $0x20] sm:$0xff]
        %v1281 = vld [vmem:[%s5 + $0x28] sm:$0xff]
        %v1282 = vld [vmem:[%s5 + $0x30] sm:$0xff]
        %v1283 = vld [vmem:[%s5 + $0x38] sm:$0xff]
        %1285 = vset.pattern.permute.xlu0 0
        %1286 = vperm.xlu0 %1285, %v1276
        %v1287 = vpop.permute.xlu0 %1286
        %1290 = vset.pattern.permute.xlu0 0
        %1291 = vperm.xlu0 %1290, %v1277
        %v1292 = vpop.permute.xlu0 %1291
        %1295 = vset.pattern.permute.xlu0 0
        %1296 = vperm.xlu0 %1295, %v1278
        %v1297 = vpop.permute.xlu0 %1296
        %1300 = vset.pattern.permute.xlu0 0
        %1301 = vperm.xlu0 %1300, %v1279
        %v1302 = vpop.permute.xlu0 %1301
        %1305 = vset.pattern.permute.xlu0 0
        %1306 = vperm.xlu0 %1305, %v1280
        %v1307 = vpop.permute.xlu0 %1306
        %1310 = vset.pattern.permute.xlu0 0
        %1311 = vperm.xlu0 %1310, %v1281
        %v1312 = vpop.permute.xlu0 %1311
        %1315 = vset.pattern.permute.xlu0 0
        %1316 = vperm.xlu0 %1315, %v1282
        %v1317 = vpop.permute.xlu0 %1316
        %1320 = vset.pattern.permute.xlu0 0
        %1321 = vperm.xlu0 %1320, %v1283
        %v1322 = vpop.permute.xlu0 %1321
        %v1325 = vsel %vm380, %v1241, 0
        %v1328 = vsel %vm380, %v1243, 0
        %v1331 = vsel %vm380, %v1245, 0
        %v1334 = vsel %vm380, %v1247, 0
        %v1337 = vsel %vm380, %v1249, 0
        %v1340 = vsel %vm380, %v1251, 0
        %v1343 = vsel %vm380, %v1253, 0
        %v1346 = vsel %vm380, %v1255, 0
        %1348 = vmatprep.subr.mxu0 0.0
        %1349 = vmatpush1.msra.mxu0 %v1256
        %1350 = vmatprep.subr.mxu0 0.0
        %1351 = vmatpush1.msra.mxu0 %v1257
        %1352 = vmatprep.subr.mxu0 0.0
        %1353 = vmatpush1.msra.mxu0 %v1258
        %1354 = vmatprep.subr.mxu0 0.0
        %1355 = vmatpush1.msra.mxu0 %v1259
        %1356 = vmatprep.subr.mxu0 0.0
        %1357 = vmatpush1.msra.mxu0 %v1260
        %1358 = vmatprep.subr.mxu0 0.0
        %1359 = vmatpush1.msra.mxu0 %v1261
        %1360 = vmatprep.subr.mxu0 0.0
        %1361 = vmatpush1.msra.mxu0 %v1262
        %1362 = vmatprep.subr.mxu0 0.0
        %1363 = vmatpush1.msra.mxu0 %v1263
        %1364 = vmatprep.subr.mxu0 0.0
        %1365 = vmatpush1.msra.mxu0 %v1264
        %1366 = vmatprep.subr.mxu0 0.0
        %1367 = vmatpush1.msra.mxu0 %v1265
        %1368 = vmatprep.subr.mxu0 0.0
        %1369 = vmatpush1.msra.mxu0 %v1266
        %1370 = vmatprep.subr.mxu0 0.0
        %1371 = vmatpush1.msra.mxu0 %v1267
        %1372 = vmatprep.subr.mxu0 0.0
        %1373 = vmatpush1.msra.mxu0 %v1268
        %1374 = vmatprep.subr.mxu0 0.0
        %1375 = vmatpush1.msra.mxu0 %v1269
        %1376 = vmatprep.subr.mxu0 0.0
        %1377 = vmatpush1.msra.mxu0 %v1270
        %1378 = vmatprep.subr.mxu0 0.0
        %1379 = vmatpush1.msra.mxu0 %v1271
        %1380 = vmatprep.subr.mxu0 0.0
        %1381 = vmatpush1.msra.mxu0 %v1272
        %1382 = vmatprep.subr.mxu0 0.0
        %1383 = vmatpush1.msra.mxu0 %v1273
        %1384 = vmatprep.subr.mxu0 0.0
        %1385 = vmatpush1.msra.mxu0 %v1274
        %1386 = vmatprep.subr.mxu0 0.0
        %1387 = vmatpush1.msra.mxu0 %v1275
        %1388 = vmatprep.subr.mxu0 0.0
        %1389 = vmatpush1.msra.mxu0 0.0
        %1390 = vmatprep.subr.mxu0 0.0
        %1391 = vmatpush1.msra.mxu0 0.0
        %1392 = vmatprep.subr.mxu0 0.0
        %1393 = vmatpush1.msra.mxu0 0.0
        %1394 = vmatprep.subr.mxu0 0.0
        %1395 = vmatpush1.msra.mxu0 0.0
        %1396 = vmatprep.subr.mxu0 0.0
        %1397 = vmatpush1.msra.mxu0 0.0
        %1398 = vmatprep.subr.mxu0 0.0
        %1399 = vmatpush1.msra.mxu0 0.0
        %1400 = vmatprep.subr.mxu0 0.0
        %1401 = vmatpush1.msra.mxu0 0.0
        %1402 = vmatprep.subr.mxu0 0.0
        %1403 = vmatpush1.msra.mxu0 0.0
        %1404 = vmatprep.subr.mxu0 0.0
        %1405 = vmatpush1.msra.mxu0 0.0
        %1406 = vmatprep.subr.mxu0 0.0
        %1407 = vmatpush1.msra.mxu0 0.0
        %1408 = vmatprep.subr.mxu0 0.0
        %1409 = vmatpush1.msra.mxu0 0.0
        %1410 = vmatprep.subr.mxu0 0.0
        %1411 = vmatpush1.msra.mxu0 0.0
        %1412 = vmatprep.mubr.f32.mxu0 %v1325
        %1413 = vmatmul.mubr.f32.gmra.mrb[0].mxu0 %v1240
        %v1414 = vpop.f32.mrb[0].mxu0
        %v1415 = vadd.f32 %v1287, %v1414
        %v1416 = vpop.f32.mrb[0].mxu0
        %1417 = vmatprep.mubr.f32.mxu0 %v1328
        %1418 = vmatmul.mubr.f32.gmra.mrb[0].mxu0 %v1242
        %v1419 = vpop.f32.mrb[0].mxu0
        %v1420 = vadd.f32 %v1292, %v1419
        %v1421 = vpop.f32.mrb[0].mxu0
        %1422 = vmatprep.mubr.f32.mxu0 %v1331
        %1423 = vmatmul.mubr.f32.gmra.mrb[0].mxu0 %v1244
        %v1424 = vpop.f32.mrb[0].mxu0
        %v1425 = vadd.f32 %v1297, %v1424
        %v1426 = vpop.f32.mrb[0].mxu0
        %1427 = vmatprep.mubr.f32.mxu0 %v1334
        %1428 = vmatmul.mubr.f32.gmra.mrb[0].mxu0 %v1246
        %v1429 = vpop.f32.mrb[0].mxu0
        %v1430 = vadd.f32 %v1302, %v1429
        %v1431 = vpop.f32.mrb[0].mxu0
        %1432 = vmatprep.mubr.f32.mxu0 %v1337
        %1433 = vmatmul.mubr.f32.gmra.mrb[0].mxu0 %v1248
        %v1434 = vpop.f32.mrb[0].mxu0
        %v1435 = vadd.f32 %v1307, %v1434
        %v1436 = vpop.f32.mrb[0].mxu0
        %1437 = vmatprep.mubr.f32.mxu0 %v1340
        %1438 = vmatmul.mubr.f32.gmra.mrb[0].mxu0 %v1250
        %v1439 = vpop.f32.mrb[0].mxu0
        %v1440 = vadd.f32 %v1312, %v1439
        %v1441 = vpop.f32.mrb[0].mxu0
        %1442 = vmatprep.mubr.f32.mxu0 %v1343
        %1443 = vmatmul.mubr.f32.gmra.mrb[0].mxu0 %v1252
        %v1444 = vpop.f32.mrb[0].mxu0
        %v1445 = vadd.f32 %v1317, %v1444
        %v1446 = vpop.f32.mrb[0].mxu0
        %1447 = vmatprep.mubr.f32.mxu0 %v1346
        %1448 = vmatmul.mubr.f32.gmra.mrb[0].mxu0 %v1254
        %v1449 = vpop.f32.mrb[0].mxu0
        %v1450 = vadd.f32 %v1322, %v1449
        %v1451 = vpop.f32.mrb[0].mxu0
        %1452 = vdwg.mxu0
        %v1453 = vtanh.pop %v1415
        %v1454 = vtanh.pop %v1420
        %v1455 = vtanh.pop %v1425
        %v1456 = vtanh.pop %v1430
        %v1457 = vtanh.pop %v1435
        %v1458 = vtanh.pop %v1440
        %v1459 = vtanh.pop %v1445
        %v1460 = vtanh.pop %v1450
        %v1461 = vlaneseq
        %v1462 = vand.u32 %v1461, 127
        loop: start=0, step=1, limit=8
        $region57: #{tpu_custom_call.1} parent=55 // loop_pre_header
          _
        $region58: #{tpu_custom_call.1} parent=55 // loop_header
          %s1464 = sphi 0, %s1468
          %p1465 = scmp.ge.s32.totalorder %s1464, 8
          %v1469 = vphi 0.0, %v2340
          %v1470 = vphi 0.0, %v2341
          %v1471 = vphi 0.0, %v2342
          %v1472 = vphi 0.0, %v2343
          %v1473 = vphi 0.0, %v2344
          %v1474 = vphi 0.0, %v2345
          %v1475 = vphi 0.0, %v2346
          %v1476 = vphi 0.0, %v2347
          %v1477 = vphi 0.0, %v2348
          %v1478 = vphi 0.0, %v2349
          %v1479 = vphi 0.0, %v2350
          %v1480 = vphi 0.0, %v2351
          %v1481 = vphi 0.0, %v2352
          %v1482 = vphi 0.0, %v2353
          %v1483 = vphi 0.0, %v2354
          %v1484 = vphi 0.0, %v2355
        $region59: #{tpu_custom_call.1} parent=55 // loop_header_branch
          %1467 = sbr.rel (%p1465) target = $region63
        $region60: #{tpu_custom_call.1} parent=55 // loop_body
          %s1485 = scalar_lea.vmem [#allocation2], %s1464
          %v1486 = vld [vmem:[%s1485] sm:$0x1]
          %s1487 = scalar_lea.vmem [#allocation3], %s1464
          %v1488 = vld [vmem:[%s1487] sm:$0x1]
          %s1489 = sshra.s32 %s1464, 3
          %s1490 = sand.u32 %s1464, 7
          %s1491 = sshra.s32 %s1464, 3
          %s1492 = sand.u32 %s1464, 7
          %s1493 = smul.u32 %s1489, 4
          %s1494 = smul.u32 %s1493, 8
          %s1495 = sadd.s32 %s1494, %s1492
          %s1496 = scalar_lea.vmem [#allocation4], %s1495
          %v1497 = vld [vmem:[%s1496] ss:$8 sm:$0xf]
          %s1498 = scalar_lea.vmem [#allocation5], %s1495
          %v1499 = vld [vmem:[%s1498] ss:$8 sm:$0xf]
          %s1500 = scalar_lea.vmem [#allocation6], %s1495
          %v1501 = vld [vmem:[%s1500] ss:$8 sm:$0xf]
          %s1502 = scalar_lea.vmem [#allocation7], %s1495
          %v1503 = vld [vmem:[%s1502] ss:$8 sm:$0xf]
          %s1504 = scalar_lea.vmem [#allocation8], %s1495
          %v1505 = vld [vmem:[%s1504] ss:$8 sm:$0xf]
          %v1507 = vrot.slane %v1488, 7
          %vm1509 = vcmask 1040384
          %v1510 = vsel %vm1509, %v1486, %v1507
          %v1512 = vsel %vm380, %v1510, 0
          %1514 = vmatprep.subr.mxu0 %v1470
          %1515 = vmatpush1.msra.mxu0 %v1469
          %1516 = vmatprep.subr.mxu0 %v1474
          %1517 = vmatpush1.msra.mxu0 %v1473
          %1518 = vmatprep.subr.mxu0 %v1478
          %1519 = vmatpush1.msra.mxu0 %v1477
          %1520 = vmatprep.subr.mxu0 %v1482
          %1521 = vmatpush1.msra.mxu0 %v1481
          %1522 = vmatprep.subr.mxu0 0.0
          %1523 = vmatpush1.msra.mxu0 0.0
          %1524 = vmatprep.subr.mxu0 0.0
          %1525 = vmatpush1.msra.mxu0 0.0
          %1526 = vmatprep.subr.mxu0 0.0
          %1527 = vmatpush1.msra.mxu0 0.0
          %1528 = vmatprep.subr.mxu0 0.0
          %1529 = vmatpush1.msra.mxu0 0.0
          %1530 = vmatprep.subr.mxu0 0.0
          %1531 = vmatpush1.msra.mxu0 0.0
          %1532 = vmatprep.subr.mxu0 0.0
          %1533 = vmatpush1.msra.mxu0 0.0
          %1534 = vmatprep.subr.mxu0 0.0
          %1535 = vmatpush1.msra.mxu0 0.0
          %1536 = vmatprep.subr.mxu0 0.0
          %1537 = vmatpush1.msra.mxu0 0.0
          %1538 = vmatprep.subr.mxu0 0.0
          %1539 = vmatpush1.msra.mxu0 0.0
          %1540 = vmatprep.subr.mxu0 0.0
          %1541 = vmatpush1.msra.mxu0 0.0
          %1542 = vmatprep.subr.mxu0 0.0
          %1543 = vmatpush1.msra.mxu0 0.0
          %1544 = vmatprep.subr.mxu0 0.0
          %1545 = vmatpush1.msra.mxu0 0.0
          %1546 = vmatprep.subr.mxu0 0.0
          %1547 = vmatpush1.msra.mxu0 0.0
          %1548 = vmatprep.subr.mxu0 0.0
          %1549 = vmatpush1.msra.mxu0 0.0
          %1550 = vmatprep.subr.mxu0 0.0
          %1551 = vmatpush1.msra.mxu0 0.0
          %1552 = vmatprep.subr.mxu0 0.0
          %1553 = vmatpush1.msra.mxu0 0.0
          %1554 = vmatprep.subr.mxu0 0.0
          %1555 = vmatpush1.msra.mxu0 0.0
          %1556 = vmatprep.subr.mxu0 0.0
          %1557 = vmatpush1.msra.mxu0 0.0
          %1558 = vmatprep.subr.mxu0 0.0
          %1559 = vmatpush1.msra.mxu0 0.0
          %1560 = vmatprep.subr.mxu0 0.0
          %1561 = vmatpush1.msra.mxu0 0.0
          %1562 = vmatprep.subr.mxu0 0.0
          %1563 = vmatpush1.msra.mxu0 0.0
          %1564 = vmatprep.subr.mxu0 0.0
          %1565 = vmatpush1.msra.mxu0 0.0
          %1566 = vmatprep.subr.mxu0 0.0
          %1567 = vmatpush1.msra.mxu0 0.0
          %1568 = vmatprep.subr.mxu0 0.0
          %1569 = vmatpush1.msra.mxu0 0.0
          %1570 = vmatprep.subr.mxu0 0.0
          %1571 = vmatpush1.msra.mxu0 0.0
          %1572 = vmatprep.subr.mxu0 0.0
          %1573 = vmatpush1.msra.mxu0 0.0
          %1574 = vmatprep.subr.mxu0 0.0
          %1575 = vmatpush1.msra.mxu0 0.0
          %1576 = vmatprep.subr.mxu0 0.0
          %1577 = vmatpush1.msra.mxu0 0.0
          %1578 = vmatprep.mubr.f32.mxu0 0.0
          %1579 = vmatmul.mubr.f32.gmra.mrb[0].mxu0 %v1512
          %v1580 = vpop.f32.mrb[0].mxu0
          %v1581 = vadd.f32 0.0, %v1580
          %v1582 = vpop.f32.mrb[0].mxu0
          %v1583 = vadd.f32 0.0, %v1582
          %1584 = vdwg.mxu0
          %1585 = vmatprep.subr.mxu0 %v1472
          %1586 = vmatpush1.msra.mxu0 %v1471
          %1587 = vmatprep.subr.mxu0 %v1476
          %1588 = vmatpush1.msra.mxu0 %v1475
          %1589 = vmatprep.subr.mxu0 %v1480
          %1590 = vmatpush1.msra.mxu0 %v1479
          %1591 = vmatprep.subr.mxu0 %v1484
          %1592 = vmatpush1.msra.mxu0 %v1483
          %1593 = vmatprep.subr.mxu0 0.0
          %1594 = vmatpush1.msra.mxu0 0.0
          %1595 = vmatprep.subr.mxu0 0.0
          %1596 = vmatpush1.msra.mxu0 0.0
          %1597 = vmatprep.subr.mxu0 0.0
          %1598 = vmatpush1.msra.mxu0 0.0
          %1599 = vmatprep.subr.mxu0 0.0
          %1600 = vmatpush1.msra.mxu0 0.0
          %1601 = vmatprep.subr.mxu0 0.0
          %1602 = vmatpush1.msra.mxu0 0.0
          %1603 = vmatprep.subr.mxu0 0.0
          %1604 = vmatpush1.msra.mxu0 0.0
          %1605 = vmatprep.subr.mxu0 0.0
          %1606 = vmatpush1.msra.mxu0 0.0
          %1607 = vmatprep.subr.mxu0 0.0
          %1608 = vmatpush1.msra.mxu0 0.0
          %1609 = vmatprep.subr.mxu0 0.0
          %1610 = vmatpush1.msra.mxu0 0.0
          %1611 = vmatprep.subr.mxu0 0.0
          %1612 = vmatpush1.msra.mxu0 0.0
          %1613 = vmatprep.subr.mxu0 0.0
          %1614 = vmatpush1.msra.mxu0 0.0
          %1615 = vmatprep.subr.mxu0 0.0
          %1616 = vmatpush1.msra.mxu0 0.0
          %1617 = vmatprep.subr.mxu0 0.0
          %1618 = vmatpush1.msra.mxu0 0.0
          %1619 = vmatprep.subr.mxu0 0.0
          %1620 = vmatpush1.msra.mxu0 0.0
          %1621 = vmatprep.subr.mxu0 0.0
          %1622 = vmatpush1.msra.mxu0 0.0
          %1623 = vmatprep.subr.mxu0 0.0
          %1624 = vmatpush1.msra.mxu0 0.0
          %1625 = vmatprep.subr.mxu0 0.0
          %1626 = vmatpush1.msra.mxu0 0.0
          %1627 = vmatprep.subr.mxu0 0.0
          %1628 = vmatpush1.msra.mxu0 0.0
          %1629 = vmatprep.subr.mxu0 0.0
          %1630 = vmatpush1.msra.mxu0 0.0
          %1631 = vmatprep.subr.mxu0 0.0
          %1632 = vmatpush1.msra.mxu0 0.0
          %1633 = vmatprep.subr.mxu0 0.0
          %1634 = vmatpush1.msra.mxu0 0.0
          %1635 = vmatprep.subr.mxu0 0.0
          %1636 = vmatpush1.msra.mxu0 0.0
          %1637 = vmatprep.subr.mxu0 0.0
          %1638 = vmatpush1.msra.mxu0 0.0
          %1639 = vmatprep.subr.mxu0 0.0
          %1640 = vmatpush1.msra.mxu0 0.0
          %1641 = vmatprep.subr.mxu0 0.0
          %1642 = vmatpush1.msra.mxu0 0.0
          %1643 = vmatprep.subr.mxu0 0.0
          %1644 = vmatpush1.msra.mxu0 0.0
          %1645 = vmatprep.subr.mxu0 0.0
          %1646 = vmatpush1.msra.mxu0 0.0
          %1647 = vmatprep.subr.mxu0 0.0
          %1648 = vmatpush1.msra.mxu0 0.0
          %1649 = vmatprep.mubr.f32.mxu0 0.0
          %1650 = vmatmul.mubr.f32.gmra.mrb[0].mxu0 %v1512
          %v1651 = vpop.f32.mrb[0].mxu0
          %v1652 = vadd.f32 0.0, %v1651
          %v1653 = vpop.f32.mrb[0].mxu0
          %v1654 = vadd.f32 0.0, %v1653
          %1655 = vdwg.mxu0
          %v1660 = vcombine.low %v1581, %v1583
          %v1661 = vcombine.low %v1652, %v1654
          %v1663 = vunpack.c.l.s4 1966171168
          %v1664 = vunpack.c.0.s8 %v1663
          %v1665 = vlaneseq
          %v1666 = vshrl.u32 %v1665, 7
          %v1667 = vsub.s32 %v1664, %v1666
          %v1668 = vrot.slane %v1660, %v1667
          %v1670 = vunpack.c.l.s4 1966171168
          %v1671 = vunpack.c.0.s8 %v1670
          %v1672 = vlaneseq
          %v1673 = vshrl.u32 %v1672, 7
          %v1674 = vsub.s32 %v1671, %v1673
          %v1675 = vrot.slane %v1661, %v1674
          %v1676 = vcombine.low %v1668, %v1675
          %v1678 = vunpack.c.l.s4 1966171168
          %v1679 = vunpack.c.0.s8 %v1678
          %v1680 = vlaneseq
          %v1681 = vshrl.u32 %v1680, 7
          %v1682 = vsub.s32 %v1679, %v1681
          %v1683 = vrot.slane %v1676, %v1682
          %v1685 = vmul.f32 %v1497, %v1683
          %v1686 = vmul.f32 %v1499, %v1683
          %v1687 = vcombine.high %v1668, %v1675
          %v1689 = vunpack.c.l.s4 1966171168
          %v1690 = vunpack.c.0.s8 %v1689
          %v1691 = vlaneseq
          %v1692 = vshrl.u32 %v1691, 7
          %v1693 = vsub.s32 %v1690, %v1692
          %v1694 = vrot.slane %v1687, %v1693
          %v1696 = vmul.f32 %v1501, %v1694
          %v1698 = vlaneseq
          %v1699 = vshrl.u32 %v1698, 7
          %v1700 = vsub.s32 0, %v1699
          %v1701 = vrot.slane %v1685, %v1700
          %v1702 = vlaneseq
          %v1703 = vshrl.u32 %v1702, 7
          %v1704 = vsub.s32 1, %v1703
          %v1705 = vrot.slane %v1685, %v1704
          %v1706 = vlaneseq
          %v1707 = vshrl.u32 %v1706, 7
          %v1708 = vsub.s32 2, %v1707
          %v1709 = vrot.slane %v1685, %v1708
          %v1710 = vlaneseq
          %v1711 = vshrl.u32 %v1710, 7
          %v1712 = vsub.s32 3, %v1711
          %v1713 = vrot.slane %v1685, %v1712
          %v1719 = vlaneseq
          %v1720 = vshrl.u32 %v1719, 7
          %v1721 = vsub.s32 0, %v1720
          %v1722 = vrot.slane %v1686, %v1721
          %v1723 = vlaneseq
          %v1724 = vshrl.u32 %v1723, 7
          %v1725 = vsub.s32 1, %v1724
          %v1726 = vrot.slane %v1686, %v1725
          %v1727 = vlaneseq
          %v1728 = vshrl.u32 %v1727, 7
          %v1729 = vsub.s32 2, %v1728
          %v1730 = vrot.slane %v1686, %v1729
          %v1731 = vlaneseq
          %v1732 = vshrl.u32 %v1731, 7
          %v1733 = vsub.s32 3, %v1732
          %v1734 = vrot.slane %v1686, %v1733
          %v1740 = vlaneseq
          %v1741 = vshrl.u32 %v1740, 7
          %v1742 = vsub.s32 0, %v1741
          %v1743 = vrot.slane %v1696, %v1742
          %v1744 = vlaneseq
          %v1745 = vshrl.u32 %v1744, 7
          %v1746 = vsub.s32 1, %v1745
          %v1747 = vrot.slane %v1696, %v1746
          %v1748 = vlaneseq
          %v1749 = vshrl.u32 %v1748, 7
          %v1750 = vsub.s32 2, %v1749
          %v1751 = vrot.slane %v1696, %v1750
          %v1752 = vlaneseq
          %v1753 = vshrl.u32 %v1752, 7
          %v1754 = vsub.s32 3, %v1753
          %v1755 = vrot.slane %v1696, %v1754
          %v1760 = vsel %vm1509, %v1701, %v1722
          %v1761 = vsel %vm1509, %v1705, %v1726
          %v1762 = vsel %vm1509, %v1709, %v1730
          %v1763 = vsel %vm1509, %v1713, %v1734
          %vm1764 = vcmask 1041408
          %v1765 = vsel %vm1764, %v1760, %v1743
          %v1766 = vsel %vm1764, %v1761, %v1747
          %v1767 = vsel %vm1764, %v1762, %v1751
          %v1768 = vsel %vm1764, %v1763, %v1755
          %v1769 = vld [vmem:[%s8] sm:$0xff]
          %v1770 = vld [vmem:[%s8 + $0x8] sm:$0xff]
          %v1771 = vld [vmem:[%s8 + $0x10] sm:$0xff]
          %v1772 = vld [vmem:[%s8 + $0x18] sm:$0xff]
          %v1773 = vld [vmem:[%s8 + $0x20] sm:$0xff]
          %v1774 = vld [vmem:[%s8 + $0x28] sm:$0xff]
          %v1775 = vld [vmem:[%s8 + $0x30] sm:$0xff]
          %v1776 = vld [vmem:[%s8 + $0x38] sm:$0xff]
          %v1777 = vld [vmem:[%s8 + $0x40] sm:$0xff]
          %v1778 = vld [vmem:[%s8 + $0x48] sm:$0xff]
          %v1779 = vld [vmem:[%s8 + $0x50] sm:$0xff]
          %v1780 = vld [vmem:[%s8 + $0x58] sm:$0xff]
          %v1781 = vld [vmem:[%s8 + $0x60] sm:$0xff]
          %v1782 = vld [vmem:[%s8 + $0x68] sm:$0xff]
          %v1783 = vld [vmem:[%s8 + $0x70] sm:$0xff]
          %v1784 = vld [vmem:[%s8 + $0x78] sm:$0xff]
          %v1785 = vld [vmem:[%s8 + $0x80] sm:$0xff]
          %v1786 = vld [vmem:[%s8 + $0x88] sm:$0xff]
          %v1787 = vld [vmem:[%s8 + $0x90] sm:$0xff]
          %v1788 = vld [vmem:[%s8 + $0x98] sm:$0xff]
          %v1789 = vld [vmem:[%s8 + $0xa0] sm:$0xff]
          %v1790 = vld [vmem:[%s8 + $0xa8] sm:$0xff]
          %v1791 = vld [vmem:[%s8 + $0xb0] sm:$0xff]
          %v1792 = vld [vmem:[%s8 + $0xb8] sm:$0xff]
          %v1793 = vld [vmem:[%s8 + $0xc0] sm:$0xff]
          %v1794 = vld [vmem:[%s8 + $0xc8] sm:$0xff]
          %v1795 = vld [vmem:[%s8 + $0xd0] sm:$0xff]
          %v1796 = vld [vmem:[%s8 + $0xd8] sm:$0xff]
          %v1797 = vld [vmem:[%s8 + $0xe0] sm:$0xff]
          %v1798 = vld [vmem:[%s8 + $0xe8] sm:$0xff]
          %v1799 = vld [vmem:[%s8 + $0xf0] sm:$0xff]
          %v1800 = vld [vmem:[%s8 + $0xf8] sm:$0xff]
          %v1801 = vld [vmem:[%s8 + $0x100] sm:$0xff]
          %v1802 = vld [vmem:[%s8 + $0x108] sm:$0xff]
          %v1803 = vld [vmem:[%s8 + $0x110] sm:$0xff]
          %v1804 = vld [vmem:[%s8 + $0x118] sm:$0xff]
          %v1805 = vld [vmem:[%s8 + $0x120] sm:$0xff]
          %v1806 = vld [vmem:[%s8 + $0x128] sm:$0xff]
          %v1807 = vld [vmem:[%s8 + $0x130] sm:$0xff]
          %v1808 = vld [vmem:[%s8 + $0x138] sm:$0xff]
          %v1809 = vld [vmem:[%s8 + $0x140] sm:$0xff]
          %v1810 = vld [vmem:[%s8 + $0x148] sm:$0xff]
          %v1811 = vld [vmem:[%s8 + $0x150] sm:$0xff]
          %v1812 = vld [vmem:[%s8 + $0x158] sm:$0xff]
          %v1813 = vld [vmem:[%s8 + $0x160] sm:$0xff]
          %v1814 = vld [vmem:[%s8 + $0x168] sm:$0xff]
          %v1815 = vld [vmem:[%s8 + $0x170] sm:$0xff]
          %v1816 = vld [vmem:[%s8 + $0x178] sm:$0xff]
          %v1817 = vld [vmem:[%s8 + $0x180] sm:$0xff]
          %v1818 = vld [vmem:[%s8 + $0x188] sm:$0xff]
          %v1819 = vld [vmem:[%s8 + $0x190] sm:$0xff]
          %v1820 = vld [vmem:[%s8 + $0x198] sm:$0xff]
          %v1821 = vld [vmem:[%s8 + $0x1a0] sm:$0xff]
          %v1822 = vld [vmem:[%s8 + $0x1a8] sm:$0xff]
          %v1823 = vld [vmem:[%s8 + $0x1b0] sm:$0xff]
          %v1824 = vld [vmem:[%s8 + $0x1b8] sm:$0xff]
          %v1825 = vld [vmem:[%s8 + $0x1c0] sm:$0xff]
          %v1826 = vld [vmem:[%s8 + $0x1c8] sm:$0xff]
          %v1827 = vld [vmem:[%s8 + $0x1d0] sm:$0xff]
          %v1828 = vld [vmem:[%s8 + $0x1d8] sm:$0xff]
          %v1829 = vld [vmem:[%s8 + $0x1e0] sm:$0xff]
          %v1830 = vld [vmem:[%s8 + $0x1e8] sm:$0xff]
          %v1831 = vld [vmem:[%s8 + $0x1f0] sm:$0xff]
          %v1832 = vld [vmem:[%s8 + $0x1f8] sm:$0xff]
          %1833 = vmatprep.subr.mxu0 0.0
          %1834 = vmatpush1.msra.mxu0 %v1769
          %1835 = vmatprep.subr.mxu0 0.0
          %1836 = vmatpush1.msra.mxu0 %v1770
          %1837 = vmatprep.subr.mxu0 0.0
          %1838 = vmatpush1.msra.mxu0 %v1771
          %1839 = vmatprep.subr.mxu0 0.0
          %1840 = vmatpush1.msra.mxu0 %v1772
          %1841 = vmatprep.subr.mxu0 0.0
          %1842 = vmatpush1.msra.mxu0 %v1773
          %1843 = vmatprep.subr.mxu0 0.0
          %1844 = vmatpush1.msra.mxu0 %v1774
          %1845 = vmatprep.subr.mxu0 0.0
          %1846 = vmatpush1.msra.mxu0 %v1775
          %1847 = vmatprep.subr.mxu0 0.0
          %1848 = vmatpush1.msra.mxu0 %v1776
          %1849 = vmatprep.subr.mxu0 0.0
          %1850 = vmatpush1.msra.mxu0 %v1777
          %1851 = vmatprep.subr.mxu0 0.0
          %1852 = vmatpush1.msra.mxu0 %v1778
          %1853 = vmatprep.subr.mxu0 0.0
          %1854 = vmatpush1.msra.mxu0 %v1779
          %1855 = vmatprep.subr.mxu0 0.0
          %1856 = vmatpush1.msra.mxu0 %v1780
          %1857 = vmatprep.subr.mxu0 0.0
          %1858 = vmatpush1.msra.mxu0 %v1781
          %1859 = vmatprep.subr.mxu0 0.0
          %1860 = vmatpush1.msra.mxu0 %v1782
          %1861 = vmatprep.subr.mxu0 0.0
          %1862 = vmatpush1.msra.mxu0 %v1783
          %1863 = vmatprep.subr.mxu0 0.0
          %1864 = vmatpush1.msra.mxu0 %v1784
          %1865 = vmatprep.subr.mxu0 0.0
          %1866 = vmatpush1.msra.mxu0 %v1785
          %1867 = vmatprep.subr.mxu0 0.0
          %1868 = vmatpush1.msra.mxu0 %v1786
          %1869 = vmatprep.subr.mxu0 0.0
          %1870 = vmatpush1.msra.mxu0 %v1787
          %1871 = vmatprep.subr.mxu0 0.0
          %1872 = vmatpush1.msra.mxu0 %v1788
          %1873 = vmatprep.subr.mxu0 0.0
          %1874 = vmatpush1.msra.mxu0 %v1789
          %1875 = vmatprep.subr.mxu0 0.0
          %1876 = vmatpush1.msra.mxu0 %v1790
          %1877 = vmatprep.subr.mxu0 0.0
          %1878 = vmatpush1.msra.mxu0 %v1791
          %1879 = vmatprep.subr.mxu0 0.0
          %1880 = vmatpush1.msra.mxu0 %v1792
          %1881 = vmatprep.subr.mxu0 0.0
          %1882 = vmatpush1.msra.mxu0 %v1793
          %1883 = vmatprep.subr.mxu0 0.0
          %1884 = vmatpush1.msra.mxu0 %v1794
          %1885 = vmatprep.subr.mxu0 0.0
          %1886 = vmatpush1.msra.mxu0 %v1795
          %1887 = vmatprep.subr.mxu0 0.0
          %1888 = vmatpush1.msra.mxu0 %v1796
          %1889 = vmatprep.subr.mxu0 0.0
          %1890 = vmatpush1.msra.mxu0 %v1797
          %1891 = vmatprep.subr.mxu0 0.0
          %1892 = vmatpush1.msra.mxu0 %v1798
          %1893 = vmatprep.subr.mxu0 0.0
          %1894 = vmatpush1.msra.mxu0 %v1799
          %1895 = vmatprep.subr.mxu0 0.0
          %1896 = vmatpush1.msra.mxu0 %v1800
          %1897 = vmatprep.mubr.f32.mxu0 %v1766
          %1898 = vmatmul.mubr.f32.gmra.mrb[0].mxu0 %v1765
          %v1899 = vpop.f32.mrb[0].mxu0
          %v1900 = vadd.f32 0.0, %v1899
          %v1901 = vpop.f32.mrb[0].mxu0
          %1902 = vdwg.mxu0
          %1903 = vmatprep.subr.mxu0 0.0
          %1904 = vmatpush1.msra.mxu0 %v1801
          %1905 = vmatprep.subr.mxu0 0.0
          %1906 = vmatpush1.msra.mxu0 %v1802
          %1907 = vmatprep.subr.mxu0 0.0
          %1908 = vmatpush1.msra.mxu0 %v1803
          %1909 = vmatprep.subr.mxu0 0.0
          %1910 = vmatpush1.msra.mxu0 %v1804
          %1911 = vmatprep.subr.mxu0 0.0
          %1912 = vmatpush1.msra.mxu0 %v1805
          %1913 = vmatprep.subr.mxu0 0.0
          %1914 = vmatpush1.msra.mxu0 %v1806
          %1915 = vmatprep.subr.mxu0 0.0
          %1916 = vmatpush1.msra.mxu0 %v1807
          %1917 = vmatprep.subr.mxu0 0.0
          %1918 = vmatpush1.msra.mxu0 %v1808
          %1919 = vmatprep.subr.mxu0 0.0
          %1920 = vmatpush1.msra.mxu0 %v1809
          %1921 = vmatprep.subr.mxu0 0.0
          %1922 = vmatpush1.msra.mxu0 %v1810
          %1923 = vmatprep.subr.mxu0 0.0
          %1924 = vmatpush1.msra.mxu0 %v1811
          %1925 = vmatprep.subr.mxu0 0.0
          %1926 = vmatpush1.msra.mxu0 %v1812
          %1927 = vmatprep.subr.mxu0 0.0
          %1928 = vmatpush1.msra.mxu0 %v1813
          %1929 = vmatprep.subr.mxu0 0.0
          %1930 = vmatpush1.msra.mxu0 %v1814
          %1931 = vmatprep.subr.mxu0 0.0
          %1932 = vmatpush1.msra.mxu0 %v1815
          %1933 = vmatprep.subr.mxu0 0.0
          %1934 = vmatpush1.msra.mxu0 %v1816
          %1935 = vmatprep.subr.mxu0 0.0
          %1936 = vmatpush1.msra.mxu0 %v1817
          %1937 = vmatprep.subr.mxu0 0.0
          %1938 = vmatpush1.msra.mxu0 %v1818
          %1939 = vmatprep.subr.mxu0 0.0
          %1940 = vmatpush1.msra.mxu0 %v1819
          %1941 = vmatprep.subr.mxu0 0.0
          %1942 = vmatpush1.msra.mxu0 %v1820
          %1943 = vmatprep.subr.mxu0 0.0
          %1944 = vmatpush1.msra.mxu0 %v1821
          %1945 = vmatprep.subr.mxu0 0.0
          %1946 = vmatpush1.msra.mxu0 %v1822
          %1947 = vmatprep.subr.mxu0 0.0
          %1948 = vmatpush1.msra.mxu0 %v1823
          %1949 = vmatprep.subr.mxu0 0.0
          %1950 = vmatpush1.msra.mxu0 %v1824
          %1951 = vmatprep.subr.mxu0 0.0
          %1952 = vmatpush1.msra.mxu0 %v1825
          %1953 = vmatprep.subr.mxu0 0.0
          %1954 = vmatpush1.msra.mxu0 %v1826
          %1955 = vmatprep.subr.mxu0 0.0
          %1956 = vmatpush1.msra.mxu0 %v1827
          %1957 = vmatprep.subr.mxu0 0.0
          %1958 = vmatpush1.msra.mxu0 %v1828
          %1959 = vmatprep.subr.mxu0 0.0
          %1960 = vmatpush1.msra.mxu0 %v1829
          %1961 = vmatprep.subr.mxu0 0.0
          %1962 = vmatpush1.msra.mxu0 %v1830
          %1963 = vmatprep.subr.mxu0 0.0
          %1964 = vmatpush1.msra.mxu0 %v1831
          %1965 = vmatprep.subr.mxu0 0.0
          %1966 = vmatpush1.msra.mxu0 %v1832
          %1967 = vmatprep.mubr.f32.mxu0 %v1768
          %1968 = vmatmul.mubr.f32.gmra.mrb[0].mxu0 %v1767
          %v1969 = vpop.f32.mrb[0].mxu0
          %v1970 = vadd.f32 %v1900, %v1969
          %v1971 = vpop.f32.mrb[0].mxu0
          %1972 = vdwg.mxu0
          %v1973 = vld [vmem:[%s7] sm:$0xff]
          %v1974 = vld [vmem:[%s7 + $0x8] sm:$0xff]
          %v1975 = vld [vmem:[%s7 + $0x10] sm:$0xff]
          %v1976 = vld [vmem:[%s7 + $0x18] sm:$0xff]
          %v1977 = vld [vmem:[%s7 + $0x20] sm:$0xff]
          %v1978 = vld [vmem:[%s7 + $0x28] sm:$0xff]
          %v1979 = vld [vmem:[%s7 + $0x30] sm:$0xff]
          %v1980 = vld [vmem:[%s7 + $0x38] sm:$0xff]
          %v1981 = vld [vmem:[%s7 + $0x40] sm:$0xff]
          %v1982 = vld [vmem:[%s7 + $0x48] sm:$0xff]
          %v1983 = vld [vmem:[%s7 + $0x50] sm:$0xff]
          %v1984 = vld [vmem:[%s7 + $0x58] sm:$0xff]
          %v1985 = vld [vmem:[%s7 + $0x60] sm:$0xff]
          %v1986 = vld [vmem:[%s7 + $0x68] sm:$0xff]
          %v1987 = vld [vmem:[%s7 + $0x70] sm:$0xff]
          %v1988 = vld [vmem:[%s7 + $0x78] sm:$0xff]
          %v1990 = vsel %vm380, %v1970, 0
          %1992 = vmatprep.subr.mxu0 %v1974
          %1993 = vmatpush1.msra.mxu0 %v1973
          %1994 = vmatprep.subr.mxu0 %v1978
          %1995 = vmatpush1.msra.mxu0 %v1977
          %1996 = vmatprep.subr.mxu0 %v1982
          %1997 = vmatpush1.msra.mxu0 %v1981
          %1998 = vmatprep.subr.mxu0 %v1986
          %1999 = vmatpush1.msra.mxu0 %v1985
          %2000 = vmatprep.subr.mxu0 0.0
          %2001 = vmatpush1.msra.mxu0 0.0
          %2002 = vmatprep.subr.mxu0 0.0
          %2003 = vmatpush1.msra.mxu0 0.0
          %2004 = vmatprep.subr.mxu0 0.0
          %2005 = vmatpush1.msra.mxu0 0.0
          %2006 = vmatprep.subr.mxu0 0.0
          %2007 = vmatpush1.msra.mxu0 0.0
          %2008 = vmatprep.subr.mxu0 0.0
          %2009 = vmatpush1.msra.mxu0 0.0
          %2010 = vmatprep.subr.mxu0 0.0
          %2011 = vmatpush1.msra.mxu0 0.0
          %2012 = vmatprep.subr.mxu0 0.0
          %2013 = vmatpush1.msra.mxu0 0.0
          %2014 = vmatprep.subr.mxu0 0.0
          %2015 = vmatpush1.msra.mxu0 0.0
          %2016 = vmatprep.subr.mxu0 0.0
          %2017 = vmatpush1.msra.mxu0 0.0
          %2018 = vmatprep.subr.mxu0 0.0
          %2019 = vmatpush1.msra.mxu0 0.0
          %2020 = vmatprep.subr.mxu0 0.0
          %2021 = vmatpush1.msra.mxu0 0.0
          %2022 = vmatprep.subr.mxu0 0.0
          %2023 = vmatpush1.msra.mxu0 0.0
          %2024 = vmatprep.subr.mxu0 0.0
          %2025 = vmatpush1.msra.mxu0 0.0
          %2026 = vmatprep.subr.mxu0 0.0
          %2027 = vmatpush1.msra.mxu0 0.0
          %2028 = vmatprep.subr.mxu0 0.0
          %2029 = vmatpush1.msra.mxu0 0.0
          %2030 = vmatprep.subr.mxu0 0.0
          %2031 = vmatpush1.msra.mxu0 0.0
          %2032 = vmatprep.subr.mxu0 0.0
          %2033 = vmatpush1.msra.mxu0 0.0
          %2034 = vmatprep.subr.mxu0 0.0
          %2035 = vmatpush1.msra.mxu0 0.0
          %2036 = vmatprep.subr.mxu0 0.0
          %2037 = vmatpush1.msra.mxu0 0.0
          %2038 = vmatprep.subr.mxu0 0.0
          %2039 = vmatpush1.msra.mxu0 0.0
          %2040 = vmatprep.subr.mxu0 0.0
          %2041 = vmatpush1.msra.mxu0 0.0
          %2042 = vmatprep.subr.mxu0 0.0
          %2043 = vmatpush1.msra.mxu0 0.0
          %2044 = vmatprep.subr.mxu0 0.0
          %2045 = vmatpush1.msra.mxu0 0.0
          %2046 = vmatprep.subr.mxu0 0.0
          %2047 = vmatpush1.msra.mxu0 0.0
          %2048 = vmatprep.subr.mxu0 0.0
          %2049 = vmatpush1.msra.mxu0 0.0
          %2050 = vmatprep.subr.mxu0 0.0
          %2051 = vmatpush1.msra.mxu0 0.0
          %2052 = vmatprep.subr.mxu0 0.0
          %2053 = vmatpush1.msra.mxu0 0.0
          %2054 = vmatprep.subr.mxu0 0.0
          %2055 = vmatpush1.msra.mxu0 0.0
          %2056 = vmatprep.mubr.f32.mxu0 0.0
          %2057 = vmatmul.mubr.f32.gmra.mrb[0].mxu0 %v1990
          %v2058 = vpop.f32.mrb[0].mxu0
          %v2059 = vadd.f32 0.0, %v2058
          %v2060 = vpop.f32.mrb[0].mxu0
          %v2061 = vadd.f32 0.0, %v2060
          %2062 = vdwg.mxu0
          %2063 = vmatprep.subr.mxu0 %v1976
          %2064 = vmatpush1.msra.mxu0 %v1975
          %2065 = vmatprep.subr.mxu0 %v1980
          %2066 = vmatpush1.msra.mxu0 %v1979
          %2067 = vmatprep.subr.mxu0 %v1984
          %2068 = vmatpush1.msra.mxu0 %v1983
          %2069 = vmatprep.subr.mxu0 %v1988
          %2070 = vmatpush1.msra.mxu0 %v1987
          %2071 = vmatprep.subr.mxu0 0.0
          %2072 = vmatpush1.msra.mxu0 0.0
          %2073 = vmatprep.subr.mxu0 0.0
          %2074 = vmatpush1.msra.mxu0 0.0
          %2075 = vmatprep.subr.mxu0 0.0
          %2076 = vmatpush1.msra.mxu0 0.0
          %2077 = vmatprep.subr.mxu0 0.0
          %2078 = vmatpush1.msra.mxu0 0.0
          %2079 = vmatprep.subr.mxu0 0.0
          %2080 = vmatpush1.msra.mxu0 0.0
          %2081 = vmatprep.subr.mxu0 0.0
          %2082 = vmatpush1.msra.mxu0 0.0
          %2083 = vmatprep.subr.mxu0 0.0
          %2084 = vmatpush1.msra.mxu0 0.0
          %2085 = vmatprep.subr.mxu0 0.0
          %2086 = vmatpush1.msra.mxu0 0.0
          %2087 = vmatprep.subr.mxu0 0.0
          %2088 = vmatpush1.msra.mxu0 0.0
          %2089 = vmatprep.subr.mxu0 0.0
          %2090 = vmatpush1.msra.mxu0 0.0
          %2091 = vmatprep.subr.mxu0 0.0
          %2092 = vmatpush1.msra.mxu0 0.0
          %2093 = vmatprep.subr.mxu0 0.0
          %2094 = vmatpush1.msra.mxu0 0.0
          %2095 = vmatprep.subr.mxu0 0.0
          %2096 = vmatpush1.msra.mxu0 0.0
          %2097 = vmatprep.subr.mxu0 0.0
          %2098 = vmatpush1.msra.mxu0 0.0
          %2099 = vmatprep.subr.mxu0 0.0
          %2100 = vmatpush1.msra.mxu0 0.0
          %2101 = vmatprep.subr.mxu0 0.0
          %2102 = vmatpush1.msra.mxu0 0.0
          %2103 = vmatprep.subr.mxu0 0.0
          %2104 = vmatpush1.msra.mxu0 0.0
          %2105 = vmatprep.subr.mxu0 0.0
          %2106 = vmatpush1.msra.mxu0 0.0
          %2107 = vmatprep.subr.mxu0 0.0
          %2108 = vmatpush1.msra.mxu0 0.0
          %2109 = vmatprep.subr.mxu0 0.0
          %2110 = vmatpush1.msra.mxu0 0.0
          %2111 = vmatprep.subr.mxu0 0.0
          %2112 = vmatpush1.msra.mxu0 0.0
          %2113 = vmatprep.subr.mxu0 0.0
          %2114 = vmatpush1.msra.mxu0 0.0
          %2115 = vmatprep.subr.mxu0 0.0
          %2116 = vmatpush1.msra.mxu0 0.0
          %2117 = vmatprep.subr.mxu0 0.0
          %2118 = vmatpush1.msra.mxu0 0.0
          %2119 = vmatprep.subr.mxu0 0.0
          %2120 = vmatpush1.msra.mxu0 0.0
          %2121 = vmatprep.subr.mxu0 0.0
          %2122 = vmatpush1.msra.mxu0 0.0
          %2123 = vmatprep.subr.mxu0 0.0
          %2124 = vmatpush1.msra.mxu0 0.0
          %2125 = vmatprep.subr.mxu0 0.0
          %2126 = vmatpush1.msra.mxu0 0.0
          %2127 = vmatprep.mubr.f32.mxu0 0.0
          %2128 = vmatmul.mubr.f32.gmra.mrb[0].mxu0 %v1990
          %v2129 = vpop.f32.mrb[0].mxu0
          %v2130 = vadd.f32 0.0, %v2129
          %v2131 = vpop.f32.mrb[0].mxu0
          %v2132 = vadd.f32 0.0, %v2131
          %2133 = vdwg.mxu0
          %v2134 = vsub.f32 %v1499, %v1497
          %v2139 = vcombine.low %v2059, %v2061
          %v2140 = vcombine.low %v2130, %v2132
          %v2142 = vunpack.c.l.s4 1966171168
          %v2143 = vunpack.c.0.s8 %v2142
          %v2144 = vlaneseq
          %v2145 = vshrl.u32 %v2144, 7
          %v2146 = vsub.s32 %v2143, %v2145
          %v2147 = vrot.slane %v2139, %v2146
          %v2149 = vunpack.c.l.s4 1966171168
          %v2150 = vunpack.c.0.s8 %v2149
          %v2151 = vlaneseq
          %v2152 = vshrl.u32 %v2151, 7
          %v2153 = vsub.s32 %v2150, %v2152
          %v2154 = vrot.slane %v2140, %v2153
          %v2155 = vcombine.low %v2147, %v2154
          %v2157 = vunpack.c.l.s4 1966171168
          %v2158 = vunpack.c.0.s8 %v2157
          %v2159 = vlaneseq
          %v2160 = vshrl.u32 %v2159, 7
          %v2161 = vsub.s32 %v2158, %v2160
          %v2162 = vrot.slane %v2155, %v2161
          %v2164 = vmul.f32 %v2134, %v2162
          %v2165 = vadd.f32 %v1503, %v2164
          %v2166 = vcombine.high %v2147, %v2154
          %v2168 = vunpack.c.l.s4 1966171168
          %v2169 = vunpack.c.0.s8 %v2168
          %v2170 = vlaneseq
          %v2171 = vshrl.u32 %v2170, 7
          %v2172 = vsub.s32 %v2169, %v2171
          %v2173 = vrot.slane %v2166, %v2172
          %v2175 = vmul.f32 %v1499, %v2173
          %v2176 = vsub.f32 %v2165, %v2175
          %v2177 = vcombine.high %v2162, %v2162
          %v2179 = vmul.f32 %v1501, %v2177
          %v2180 = vsub.f32 %v1505, %v2179
          %v2181 = vstv %s1464
          %vm2182 = vcmp.eq.s32.totalorder %v1462, %v2181
          %v2183 = vsel %vm2182, 1, 0
          %v2184 = vcvt.s32.f32 %v2183
          %v2185 = vmul.f32 %v1453, %v2184
          %v2186 = vmul.f32 %v1454, %v2184
          %v2187 = vmul.f32 %v1455, %v2184
          %v2188 = vmul.f32 %v1456, %v2184
          %v2189 = vmul.f32 %v1457, %v2184
          %v2190 = vmul.f32 %v1458, %v2184
          %v2191 = vmul.f32 %v1459, %v2184
          %v2192 = vmul.f32 %v1460, %v2184
          %vm2193 = vcmask 64512
          %v2194 = vsel %vm2193, %v2185, 0.0
          %2195 = vadd.xlane.f32.xlu0 %v2194
          %v2196 = vpop.xlane.xlu0 %2195
          %v2197 = vsel %vm2193, %v2186, 0.0
          %2198 = vadd.xlane.f32.xlu0 %v2197
          %v2199 = vpop.xlane.xlu0 %2198
          %v2200 = vsel %vm2193, %v2187, 0.0
          %2201 = vadd.xlane.f32.xlu0 %v2200
          %v2202 = vpop.xlane.xlu0 %2201
          %v2203 = vsel %vm2193, %v2188, 0.0
          %2204 = vadd.xlane.f32.xlu0 %v2203
          %v2205 = vpop.xlane.xlu0 %2204
          %v2206 = vsel %vm2193, %v2189, 0.0
          %2207 = vadd.xlane.f32.xlu0 %v2206
          %v2208 = vpop.xlane.xlu0 %2207
          %v2209 = vsel %vm2193, %v2190, 0.0
          %2210 = vadd.xlane.f32.xlu0 %v2209
          %v2211 = vpop.xlane.xlu0 %2210
          %v2212 = vsel %vm2193, %v2191, 0.0
          %2213 = vadd.xlane.f32.xlu0 %v2212
          %v2214 = vpop.xlane.xlu0 %2213
          %v2215 = vsel %vm2193, %v2192, 0.0
          %2216 = vadd.xlane.f32.xlu0 %v2215
          %v2217 = vpop.xlane.xlu0 %2216
          %v2219 = vlaneseq
          %v2220 = vshrl.u32 %v2219, 7
          %v2221 = vsub.s32 0, %v2220
          %v2222 = vrot.slane %v2176, %v2221
          %v2223 = vlaneseq
          %v2224 = vshrl.u32 %v2223, 7
          %v2225 = vsub.s32 1, %v2224
          %v2226 = vrot.slane %v2176, %v2225
          %v2227 = vlaneseq
          %v2228 = vshrl.u32 %v2227, 7
          %v2229 = vsub.s32 2, %v2228
          %v2230 = vrot.slane %v2176, %v2229
          %v2231 = vlaneseq
          %v2232 = vshrl.u32 %v2231, 7
          %v2233 = vsub.s32 3, %v2232
          %v2234 = vrot.slane %v2176, %v2233
          %v2239 = vmul.f32 %v2196, %v2222
          %v2240 = vmul.f32 %v2196, %v2226
          %v2241 = vmul.f32 %v2196, %v2230
          %v2242 = vmul.f32 %v2196, %v2234
          %v2243 = vmul.f32 %v2199, %v2222
          %v2244 = vmul.f32 %v2199, %v2226
          %v2245 = vmul.f32 %v2199, %v2230
          %v2246 = vmul.f32 %v2199, %v2234
          %v2247 = vmul.f32 %v2202, %v2222
          %v2248 = vmul.f32 %v2202, %v2226
          %v2249 = vmul.f32 %v2202, %v2230
          %v2250 = vmul.f32 %v2202, %v2234
          %v2251 = vmul.f32 %v2205, %v2222
          %v2252 = vmul.f32 %v2205, %v2226
          %v2253 = vmul.f32 %v2205, %v2230
          %v2254 = vmul.f32 %v2205, %v2234
          %v2256 = vlaneseq
          %v2257 = vshrl.u32 %v2256, 7
          %v2258 = vsub.s32 0, %v2257
          %v2259 = vrot.slane %v2180, %v2258
          %v2260 = vlaneseq
          %v2261 = vshrl.u32 %v2260, 7
          %v2262 = vsub.s32 1, %v2261
          %v2263 = vrot.slane %v2180, %v2262
          %v2264 = vlaneseq
          %v2265 = vshrl.u32 %v2264, 7
          %v2266 = vsub.s32 2, %v2265
          %v2267 = vrot.slane %v2180, %v2266
          %v2268 = vlaneseq
          %v2269 = vshrl.u32 %v2268, 7
          %v2270 = vsub.s32 3, %v2269
          %v2271 = vrot.slane %v2180, %v2270
          %v2276 = vmul.f32 %v2208, %v2259
          %v2277 = vmul.f32 %v2208, %v2263
          %v2278 = vmul.f32 %v2208, %v2267
          %v2279 = vmul.f32 %v2208, %v2271
          %v2280 = vmul.f32 %v2211, %v2259
          %v2281 = vmul.f32 %v2211, %v2263
          %v2282 = vmul.f32 %v2211, %v2267
          %v2283 = vmul.f32 %v2211, %v2271
          %v2284 = vmul.f32 %v2214, %v2259
          %v2285 = vmul.f32 %v2214, %v2263
          %v2286 = vmul.f32 %v2214, %v2267
          %v2287 = vmul.f32 %v2214, %v2271
          %v2288 = vmul.f32 %v2217, %v2259
          %v2289 = vmul.f32 %v2217, %v2263
          %v2290 = vmul.f32 %v2217, %v2267
          %v2291 = vmul.f32 %v2217, %v2271
          %v2292 = vadd.f32 %v2239, %v2276
          %v2293 = vadd.f32 %v2240, %v2277
          %v2294 = vadd.f32 %v2241, %v2278
          %v2295 = vadd.f32 %v2242, %v2279
          %v2296 = vadd.f32 %v2243, %v2280
          %v2297 = vadd.f32 %v2244, %v2281
          %v2298 = vadd.f32 %v2245, %v2282
          %v2299 = vadd.f32 %v2246, %v2283
          %v2300 = vadd.f32 %v2247, %v2284
          %v2301 = vadd.f32 %v2248, %v2285
          %v2302 = vadd.f32 %v2249, %v2286
          %v2303 = vadd.f32 %v2250, %v2287
          %v2304 = vadd.f32 %v2251, %v2288
          %v2305 = vadd.f32 %v2252, %v2289
          %v2306 = vadd.f32 %v2253, %v2290
          %v2307 = vadd.f32 %v2254, %v2291
          %v2308 = vmax.f32 %v2292, -1.0
          %v2309 = vmax.f32 %v2293, -1.0
          %v2310 = vmax.f32 %v2294, -1.0
          %v2311 = vmax.f32 %v2295, -1.0
          %v2312 = vmax.f32 %v2296, -1.0
          %v2313 = vmax.f32 %v2297, -1.0
          %v2314 = vmax.f32 %v2298, -1.0
          %v2315 = vmax.f32 %v2299, -1.0
          %v2316 = vmax.f32 %v2300, -1.0
          %v2317 = vmax.f32 %v2301, -1.0
          %v2318 = vmax.f32 %v2302, -1.0
          %v2319 = vmax.f32 %v2303, -1.0
          %v2320 = vmax.f32 %v2304, -1.0
          %v2321 = vmax.f32 %v2305, -1.0
          %v2322 = vmax.f32 %v2306, -1.0
          %v2323 = vmax.f32 %v2307, -1.0
          %v2324 = vmin.f32 %v2308, 1.0
          %v2325 = vmin.f32 %v2309, 1.0
          %v2326 = vmin.f32 %v2310, 1.0
          %v2327 = vmin.f32 %v2311, 1.0
          %v2328 = vmin.f32 %v2312, 1.0
          %v2329 = vmin.f32 %v2313, 1.0
          %v2330 = vmin.f32 %v2314, 1.0
          %v2331 = vmin.f32 %v2315, 1.0
          %v2332 = vmin.f32 %v2316, 1.0
          %v2333 = vmin.f32 %v2317, 1.0
          %v2334 = vmin.f32 %v2318, 1.0
          %v2335 = vmin.f32 %v2319, 1.0
          %v2336 = vmin.f32 %v2320, 1.0
          %v2337 = vmin.f32 %v2321, 1.0
          %v2338 = vmin.f32 %v2322, 1.0
          %v2339 = vmin.f32 %v2323, 1.0
          %v2340 = vadd.f32 %v1469, %v2324
          %v2341 = vadd.f32 %v1470, %v2325
          %v2342 = vadd.f32 %v1471, %v2326
          %v2343 = vadd.f32 %v1472, %v2327
          %v2344 = vadd.f32 %v1473, %v2328
          %v2345 = vadd.f32 %v1474, %v2329
          %v2346 = vadd.f32 %v1475, %v2330
          %v2347 = vadd.f32 %v1476, %v2331
          %v2348 = vadd.f32 %v1477, %v2332
          %v2349 = vadd.f32 %v1478, %v2333
          %v2350 = vadd.f32 %v1479, %v2334
          %v2351 = vadd.f32 %v1480, %v2335
          %v2352 = vadd.f32 %v1481, %v2336
          %v2353 = vadd.f32 %v1482, %v2337
          %v2354 = vadd.f32 %v1483, %v2338
          %v2355 = vadd.f32 %v1484, %v2339
        $region61: #{tpu_custom_call.1} parent=55 // loop_footer
          %s1468 = sadd.s32 1, %s1464
        $region62: #{tpu_custom_call.1} parent=55 // loop_footer_branch
          %1463 = sbr.rel target = $region58
        $region63: #{tpu_custom_call.1} parent=55 // loop_exit
          _
        %2356 = vst [vmem:[%s340] sm:$0xff] %v1469
        %2357 = vst [vmem:[%s340 + $0x8] sm:$0xff] %v1470
        %2358 = vst [vmem:[%s340 + $0x10] sm:$0xff] %v1471
        %2359 = vst [vmem:[%s340 + $0x18] sm:$0xff] %v1472
        %2360 = vst [vmem:[%s340 + $0x20] sm:$0xff] %v1473
        %2361 = vst [vmem:[%s340 + $0x28] sm:$0xff] %v1474
        %2362 = vst [vmem:[%s340 + $0x30] sm:$0xff] %v1475
        %2363 = vst [vmem:[%s340 + $0x38] sm:$0xff] %v1476
        %2364 = vst [vmem:[%s340 + $0x40] sm:$0xff] %v1477
        %2365 = vst [vmem:[%s340 + $0x48] sm:$0xff] %v1478
        %2366 = vst [vmem:[%s340 + $0x50] sm:$0xff] %v1479
        %2367 = vst [vmem:[%s340 + $0x58] sm:$0xff] %v1480
        %2368 = vst [vmem:[%s340 + $0x60] sm:$0xff] %v1481
        %2369 = vst [vmem:[%s340 + $0x68] sm:$0xff] %v1482
        %2370 = vst [vmem:[%s340 + $0x70] sm:$0xff] %v1483
        %2371 = vst [vmem:[%s340 + $0x78] sm:$0xff] %v1484
        %s2372 = sand.u32 %s230, 1
        %s2373 = scalar_lea.sflag [#allocation10], %s2372
        %s2374 = sand.u32 %s230, 1
        %s2375 = smul.addr %s2374, 128
        %s2376 = scalar_lea.vmem [#allocation9], %s2375
        // Predicated region
        $region64: #{tpu_custom_call.1} parent=55 // pred_check
          %p2377 = pneg %p240
        $region65: #{tpu_custom_call.1} parent=55 // pred_check_branch
          %2379 = sbr.rel (%p2377) target = $region67
        $region66: #{tpu_custom_call.1} parent=55 // pred_region
          %s2381 = ssub.s32 2048, 2048
          %2382 = vsyncadd %s2373, %s2381
          %s2383 = smul.addr %s23, 16
          %s2384 = smul.addr %s2383, 128
          %s2385 = scalar_lea.hbm %s9, %s2384
          %s2386 = sshll.u32 %s2376, 4
          %s2387 = int_to_ptr.vmem [resolvable:$true] %s2386
          %2392 = dma.vmem_to_hbm [thread:$0]  %s2387, 2048, %s2385, %s2373, 512, 512, 32
        $region67: #{tpu_custom_call.1} parent=55 // pred_fallthru
          _
      $region56: #{tpu_custom_call.1} parent=5 // pred_fallthru
        _
      %p2393 = scmp.le.s32.totalorder 2, %s18
      // Predicated region
      $region68: #{tpu_custom_call.1} parent=5 // pred_check
        %p2394 = pneg %p2393
      $region69: #{tpu_custom_call.1} parent=5 // pred_check_branch
        %2396 = sbr.rel (%p2394) target = $region71
      $region70: #{tpu_custom_call.1} parent=5 // pred_region
        %s2397 = ssub.s32 %s18, 2
        // Predicated region
        $region72: #{tpu_custom_call.1} parent=70 // pred_check
          %p2398 = pneg %p246
        $region73: #{tpu_custom_call.1} parent=70 // pred_check_branch
          %2400 = sbr.rel (%p2398) target = $region75
        $region74: #{tpu_custom_call.1} parent=70 // pred_region
          %s2401 = sand.u32 %s231, 1
          %s2402 = scalar_lea.sflag [#allocation10], %s2401
          %s2403 = sand.u32 %s231, 1
          %s2404 = smul.addr %s2403, 128
          %s2405 = scalar_lea.vmem [#allocation9], %s2404
          %2406 = dma.done %s2402, 2048
        $region75: #{tpu_custom_call.1} parent=70 // pred_fallthru
          _
      $region71: #{tpu_custom_call.1} parent=5 // pred_fallthru
        _
    $region6: #{tpu_custom_call.1} parent=1 // loop_footer
      %s22 = sadd.s32 1, %s18
    $region7: #{tpu_custom_call.1} parent=1 // loop_footer_branch
      %17 = sbr.rel target = $region3
    $region8: #{tpu_custom_call.1} parent=1 // loop_exit
      _
    %2407 = vsyncpa [#allocation10], 1
    %s2408 = scalar_lea.sflag [#allocation10], 1
    %2409 = vsyncpa %s2408, 1

</llo_original>
